<compile_context>
chip_gen: v7x
topology: tpu7x:2x2x1
jax: 0.10.0
libtpu: 0.0.40
codegen_flags: <defaults>
</compile_context>

<pallas_src>
import jax
import jax.numpy as jnp
from jax.experimental import pallas as pl
from jax.experimental.pallas import tpu as pltpu

NEG_SLOPE = 0.01                     # nn.LeakyReLU default negative slope
_VMEM_BUDGET = 24 * 1024 * 1024      # conservative per-step tile budget (all gens)


def _round_up(a, m):
    return ((a + m - 1) // m) * m


def _cnn_encoder_kernel(wc_ref, bc_ref, p_ref, wf_ref, bf_ref, out_ref, flat_ref):
    # wc_ref:   SMEM (Cout, K)       conv weight taps (scalars)
    # bc_ref:   SMEM (Cout,)         conv bias (scalars)
    # p_ref:    VMEM (K, TB, HW)     im2col patches for this batch tile
    # wf_ref:   VMEM (Cout*HW, TL)   fc weight tile (rows in NCHW-flatten order)
    # bf_ref:   VMEM (1, TL)         fc bias tile
    # out_ref:  VMEM (TB, TL)        lane-dense output tile
    # flat_ref: VMEM (TB, Cout*HW)   scratch: conv activations, batch-major
    cout, ksq = wc_ref.shape
    hw = p_ref.shape[2]

    # Conv (+bias, +LeakyReLU) runs once per batch tile; latent tiles
    # (grid axis 1) reuse the flat scratch.
    @pl.when(pl.program_id(1) == 0)
    def _conv():
        # Hoist every SMEM scalar read out of the accumulation chain.
        taps = [[wc_ref[c, k] for k in range(ksq)] for c in range(cout)]
        bias = [bc_ref[c] for c in range(cout)]
        for c in range(cout):
            # One fused sum per channel -> each (TB, HW) lane slice of the
            # flat scratch is written exactly once (no per-tap VMEM RMW).
            acc = taps[c][0] * p_ref[0]
            for k in range(1, ksq):
                acc = acc + taps[c][k] * p_ref[k]
            acc = acc + bias[c]
            # Lane-slice write; column index c*HW + hw == PyTorch NCHW flatten.
            flat_ref[:, c * hw:(c + 1) * hw] = jnp.where(
                acc >= 0, acc, NEG_SLOPE * acc)

    # Dropout(p=0) is identity.  Fused FC: one lane-dense MXU matmul per tile.
    out = jnp.dot(flat_ref[...].astype(wf_ref.dtype), wf_ref[...],
                  preferred_element_type=jnp.float32)
    out_ref[...] = (out + bf_ref[...]).astype(out_ref.dtype)


def _choose_tiles(B, L, K, HW, cout, wf_itemsize):
    """Pick (TB, TL, LP, footprint) under the VMEM budget."""
    LP = _round_up(L, 128)
    TL = min(LP, 512)
    # Shrink the latent tile first if the FC-weight block dominates the budget
    # (keep TL a multiple of 128 so output stores stay unmasked lane-dense).
    while TL > 128 and 2 * cout * HW * TL * wf_itemsize > _VMEM_BUDGET // 2:
        TL -= 128
    LP = _round_up(L, TL)

    def footprint(tb):
        return (2 * K * tb * HW * 4                 # patches (2 pipeline bufs)
                + 2 * cout * HW * TL * wf_itemsize  # fc weight (2 bufs)
                + 2 * TL * 4                        # fc bias   (2 bufs)
                + tb * cout * HW * 4                # flat scratch
                + 2 * tb * TL * 4)                  # output tile (2 bufs)

    sub = 16 if wf_itemsize < 4 else 8              # bf16 packs 2 rows/sublane
    tb = max(sub, _round_up(min(B, 512), sub))
    while tb > sub and footprint(tb) > _VMEM_BUDGET:
        tb -= sub
    return tb, TL, LP, footprint(tb)


def cnn_encoder_forward(x, conv_w, conv_b, fc_w, fc_b, *, kernel_size=5,
                        padding=2, compute_dtype=jnp.float32):
    """x: (B, 1, H, W) f32 NCHW -> (B, latent_dimensions) f32.

    compute_dtype=jnp.bfloat16 casts the FC operands (accumulation stays f32)
    for the bf16-native MXUs on v6e/v7x; the default f32 matches PyTorch.
    """
    B, Cin, H, W = x.shape
    assert Cin == 1, "CNNEncoder hard-codes a 1-channel input"
    Cout = conv_w.shape[0]
    L = fc_w.shape[0]
    HW = H * W
    K = kernel_size * kernel_size
    wf_itemsize = jnp.dtype(compute_dtype).itemsize

    TB, TL, LP, fp = _choose_tiles(B, L, K, HW, Cout, wf_itemsize)
    grid_b = pl.cdiv(B, TB)          # 1 step for small batches (no forced split)
    grid_l = LP // TL
    B_pad = grid_b * TB
    vmem_limit = int(min(64 << 20, max(16 << 20, 2 * fp + (4 << 20))))

    # --- wrapper-side glue: im2col patches + parameter repacking -----------
    # TODO(synk): for very large batches on bandwidth-limited v5e, build the K
    # shifted views in-kernel from a padded-image block to cut ~K x im2col
    # HBM traffic (rectangular im2col in the wrapper is fine at these sizes).
    xp = jnp.pad(x[:, 0].astype(jnp.float32),
                 ((0, B_pad - B), (padding, padding), (padding, padding)))
    cols = [xp[:, kh:kh + H, kw:kw + W].reshape(B_pad, HW)
            for kh in range(kernel_size) for kw in range(kernel_size)]
    patches = jnp.stack(cols, axis=0)                        # (K, B_pad, HW)

    wc = conv_w.reshape(Cout, K).astype(jnp.float32)         # SMEM scalars
    bc = conv_b.reshape(Cout).astype(jnp.float32)            # SMEM scalars
    # PyTorch Linear: y = flat @ fc_w.T + fc_b, flat column = c*HW + hw.
    wf = jnp.zeros((Cout * HW, LP), compute_dtype)
    wf = wf.at[:, :L].set(fc_w.T.astype(compute_dtype))
    bf = jnp.zeros((1, LP), jnp.float32).at[:, :L].set(fc_b.astype(jnp.float32))

    # wf/bf keep a constant block index along the batch axis, so the pipeline
    # does not re-DMA them per step; the second buffer only costs residency.
    # TODO(synk): also tile the Cout*HW contraction axis (with an accumulator)
    # for configs where a single (Cout*HW, TL) weight block exceeds VMEM.
    out = pl.pallas_call(
        _cnn_encoder_kernel,
        out_shape=jax.ShapeDtypeStruct((B_pad, LP), jnp.float32),
        grid_spec=pltpu.PrefetchScalarGridSpec(
            num_scalar_prefetch=0,
            grid=(grid_b, grid_l),
            in_specs=[
                pl.BlockSpec(memory_space=pltpu.MemorySpace.SMEM),     # wc
                pl.BlockSpec(memory_space=pltpu.MemorySpace.SMEM),     # bc
                pl.BlockSpec((K, TB, HW), lambda b, l: (0, b, 0)),     # patches
                pl.BlockSpec((Cout * HW, TL), lambda b, l: (0, l)),    # wf
                pl.BlockSpec((1, TL), lambda b, l: (0, l)),            # bf
            ],
            out_specs=pl.BlockSpec((TB, TL), lambda b, l: (b, l)),
            scratch_shapes=[pltpu.VMEM((TB, Cout * HW), jnp.float32)],
        ),
        compiler_params=pltpu.CompilerParams(
            dimension_semantics=("parallel", "arbitrary"),
            vmem_limit_bytes=vmem_limit),
    )(wc, bc, patches, wf, bf)
    return out[:B, :L]


def _reference(x, conv_w, conv_b, fc_w, fc_b, *, padding=2):
    """Pure-JAX reference mirroring the PyTorch forward (for verification)."""
    conv = jax.lax.conv_general_dilated(
        x, conv_w, window_strides=(1, 1),
        padding=((padding, padding), (padding, padding)),
        dimension_numbers=("NCHW", "OIHW", "NCHW"))
    conv = conv + conv_b.reshape(1, -1, 1, 1)
    act = jnp.where(conv >= 0, conv, NEG_SLOPE * conv)
    flat = act.reshape(act.shape[0], -1)
    return flat @ fc_w.T + fc_b


if __name__ == "__main__":
    # Module config: feature_size=(16,16), channels=(4,4) -> one conv 1->4,
    # k=5, stride=1, pad=2; latent_dimensions=32; dropout=0; variational=False.
    B, H, W = 2, 16, 16
    Cout, ksize, latent = 4, 5, 32

    key = jax.random.PRNGKey(0)
    kx, kcw, kcb, kfw, kfb = jax.random.split(key, 5)
    x = jax.random.normal(kx, (B, 1, H, W), dtype=jnp.float32)
    conv_w = 0.1 * jax.random.normal(kcw, (Cout, 1, ksize, ksize), dtype=jnp.float32)
    conv_b = 0.1 * jax.random.normal(kcb, (Cout,), dtype=jnp.float32)
    fc_w = 0.05 * jax.random.normal(kfw, (latent, Cout * H * W), dtype=jnp.float32)
    fc_b = 0.05 * jax.random.normal(kfb, (latent,), dtype=jnp.float32)

    out = cnn_encoder_forward(x, conv_w, conv_b, fc_w, fc_b,
                              kernel_size=ksize, padding=2)
    out = jax.block_until_ready(out)

    ref = _reference(x, conv_w, conv_b, fc_w, fc_b, padding=2)
    assert out.shape == (B, latent)
    assert jnp.allclose(out, ref, rtol=1e-4, atol=1e-4), (
        f"max abs err = {jnp.max(jnp.abs(out - ref))}")
    print("KERNEL_OK")
</pallas_src>

<mosaic_0001>
module attributes {stable_mosaic.version = 11 : i64} {
  func.func @_cnn_encoder_kernel(%arg0: i32, %arg1: i32, %arg2: memref<4x25xf32, #tpu.memory_space<smem>>, %arg3: memref<4xf32, #tpu.memory_space<smem>>, %arg4: memref<25x8x256xf32, #tpu.memory_space<vmem>>, %arg5: memref<1024x128xf32, #tpu.memory_space<vmem>>, %arg6: memref<1x128xf32, #tpu.memory_space<vmem>>, %arg7: memref<8x128xf32, #tpu.memory_space<vmem>>, %arg8: memref<8x1024xf32, #tpu.memory_space<vmem>>) attributes {dimension_semantics = [#tpu.dimension_semantics<parallel>, #tpu.dimension_semantics<arbitrary>], iteration_bounds = array<i64: 1, 1>, scalar_prefetch = 0 : i64, scratch_operands = 1 : i64, tpu.core_type = #tpu.core_type<tc>, window_params = [{transform_indices = @transform_0, window_bounds = array<i64: 4, 25>}, {transform_indices = @transform_1, window_bounds = array<i64: 4>}, {transform_indices = @transform_2, window_bounds = array<i64: 25, 8, 256>}, {transform_indices = @transform_3, window_bounds = array<i64: 1024, 128>}, {transform_indices = @transform_4, window_bounds = array<i64: 1, 128>}, {transform_indices = @transform_5, window_bounds = array<i64: 8, 128>}]} {
    %c0_i32 = arith.constant 0 : i32
    %0 = arith.cmpi eq, %arg1, %c0_i32 : i32
    %1 = arith.extui %0 : i1 to i32
    %c0_i32_0 = arith.constant 0 : i32
    %2 = arith.cmpi ne, %1, %c0_i32_0 : i32
    scf.if %2 {
      %c0_8 = arith.constant 0 : index
      %c0_9 = arith.constant 0 : index
      %10 = memref.load %arg2[%c0_8, %c0_9] : memref<4x25xf32, #tpu.memory_space<smem>>
      %c0_10 = arith.constant 0 : index
      %c1 = arith.constant 1 : index
      %11 = memref.load %arg2[%c0_10, %c1] : memref<4x25xf32, #tpu.memory_space<smem>>
      %c0_11 = arith.constant 0 : index
      %c2 = arith.constant 2 : index
      %12 = memref.load %arg2[%c0_11, %c2] : memref<4x25xf32, #tpu.memory_space<smem>>
      %c0_12 = arith.constant 0 : index
      %c3 = arith.constant 3 : index
      %13 = memref.load %arg2[%c0_12, %c3] : memref<4x25xf32, #tpu.memory_space<smem>>
      %c0_13 = arith.constant 0 : index
      %c4 = arith.constant 4 : index
      %14 = memref.load %arg2[%c0_13, %c4] : memref<4x25xf32, #tpu.memory_space<smem>>
      %c0_14 = arith.constant 0 : index
      %c5 = arith.constant 5 : index
      %15 = memref.load %arg2[%c0_14, %c5] : memref<4x25xf32, #tpu.memory_space<smem>>
      %c0_15 = arith.constant 0 : index
      %c6 = arith.constant 6 : index
      %16 = memref.load %arg2[%c0_15, %c6] : memref<4x25xf32, #tpu.memory_space<smem>>
      %c0_16 = arith.constant 0 : index
      %c7 = arith.constant 7 : index
      %17 = memref.load %arg2[%c0_16, %c7] : memref<4x25xf32, #tpu.memory_space<smem>>
      %c0_17 = arith.constant 0 : index
      %c8 = arith.constant 8 : index
      %18 = memref.load %arg2[%c0_17, %c8] : memref<4x25xf32, #tpu.memory_space<smem>>
      %c0_18 = arith.constant 0 : index
      %c9 = arith.constant 9 : index
      %19 = memref.load %arg2[%c0_18, %c9] : memref<4x25xf32, #tpu.memory_space<smem>>
      %c0_19 = arith.constant 0 : index
      %c10 = arith.constant 10 : index
      %20 = memref.load %arg2[%c0_19, %c10] : memref<4x25xf32, #tpu.memory_space<smem>>
      %c0_20 = arith.constant 0 : index
      %c11 = arith.constant 11 : index
      %21 = memref.load %arg2[%c0_20, %c11] : memref<4x25xf32, #tpu.memory_space<smem>>
      %c0_21 = arith.constant 0 : index
      %c12 = arith.constant 12 : index
      %22 = memref.load %arg2[%c0_21, %c12] : memref<4x25xf32, #tpu.memory_space<smem>>
      %c0_22 = arith.constant 0 : index
      %c13 = arith.constant 13 : index
      %23 = memref.load %arg2[%c0_22, %c13] : memref<4x25xf32, #tpu.memory_space<smem>>
      %c0_23 = arith.constant 0 : index
      %c14 = arith.constant 14 : index
      %24 = memref.load %arg2[%c0_23, %c14] : memref<4x25xf32, #tpu.memory_space<smem>>
      %c0_24 = arith.constant 0 : index
      %c15 = arith.constant 15 : index
      %25 = memref.load %arg2[%c0_24, %c15] : memref<4x25xf32, #tpu.memory_space<smem>>
      %c0_25 = arith.constant 0 : index
      %c16 = arith.constant 16 : index
      %26 = memref.load %arg2[%c0_25, %c16] : memref<4x25xf32, #tpu.memory_space<smem>>
      %c0_26 = arith.constant 0 : index
      %c17 = arith.constant 17 : index
      %27 = memref.load %arg2[%c0_26, %c17] : memref<4x25xf32, #tpu.memory_space<smem>>
      %c0_27 = arith.constant 0 : index
      %c18 = arith.constant 18 : index
      %28 = memref.load %arg2[%c0_27, %c18] : memref<4x25xf32, #tpu.memory_space<smem>>
      %c0_28 = arith.constant 0 : index
      %c19 = arith.constant 19 : index
      %29 = memref.load %arg2[%c0_28, %c19] : memref<4x25xf32, #tpu.memory_space<smem>>
      %c0_29 = arith.constant 0 : index
      %c20 = arith.constant 20 : index
      %30 = memref.load %arg2[%c0_29, %c20] : memref<4x25xf32, #tpu.memory_space<smem>>
      %c0_30 = arith.constant 0 : index
      %c21 = arith.constant 21 : index
      %31 = memref.load %arg2[%c0_30, %c21] : memref<4x25xf32, #tpu.memory_space<smem>>
      %c0_31 = arith.constant 0 : index
      %c22 = arith.constant 22 : index
      %32 = memref.load %arg2[%c0_31, %c22] : memref<4x25xf32, #tpu.memory_space<smem>>
      %c0_32 = arith.constant 0 : index
      %c23 = arith.constant 23 : index
      %33 = memref.load %arg2[%c0_32, %c23] : memref<4x25xf32, #tpu.memory_space<smem>>
      %c0_33 = arith.constant 0 : index
      %c24 = arith.constant 24 : index
      %34 = memref.load %arg2[%c0_33, %c24] : memref<4x25xf32, #tpu.memory_space<smem>>
      %c1_34 = arith.constant 1 : index
      %c0_35 = arith.constant 0 : index
      %35 = memref.load %arg2[%c1_34, %c0_35] : memref<4x25xf32, #tpu.memory_space<smem>>
      %c1_36 = arith.constant 1 : index
      %c1_37 = arith.constant 1 : index
      %36 = memref.load %arg2[%c1_36, %c1_37] : memref<4x25xf32, #tpu.memory_space<smem>>
      %c1_38 = arith.constant 1 : index
      %c2_39 = arith.constant 2 : index
      %37 = memref.load %arg2[%c1_38, %c2_39] : memref<4x25xf32, #tpu.memory_space<smem>>
      %c1_40 = arith.constant 1 : index
      %c3_41 = arith.constant 3 : index
      %38 = memref.load %arg2[%c1_40, %c3_41] : memref<4x25xf32, #tpu.memory_space<smem>>
      %c1_42 = arith.constant 1 : index
      %c4_43 = arith.constant 4 : index
      %39 = memref.load %arg2[%c1_42, %c4_43] : memref<4x25xf32, #tpu.memory_space<smem>>
      %c1_44 = arith.constant 1 : index
      %c5_45 = arith.constant 5 : index
      %40 = memref.load %arg2[%c1_44, %c5_45] : memref<4x25xf32, #tpu.memory_space<smem>>
      %c1_46 = arith.constant 1 : index
      %c6_47 = arith.constant 6 : index
      %41 = memref.load %arg2[%c1_46, %c6_47] : memref<4x25xf32, #tpu.memory_space<smem>>
      %c1_48 = arith.constant 1 : index
      %c7_49 = arith.constant 7 : index
      %42 = memref.load %arg2[%c1_48, %c7_49] : memref<4x25xf32, #tpu.memory_space<smem>>
      %c1_50 = arith.constant 1 : index
      %c8_51 = arith.constant 8 : index
      %43 = memref.load %arg2[%c1_50, %c8_51] : memref<4x25xf32, #tpu.memory_space<smem>>
      %c1_52 = arith.constant 1 : index
      %c9_53 = arith.constant 9 : index
      %44 = memref.load %arg2[%c1_52, %c9_53] : memref<4x25xf32, #tpu.memory_space<smem>>
      %c1_54 = arith.constant 1 : index
      %c10_55 = arith.constant 10 : index
      %45 = memref.load %arg2[%c1_54, %c10_55] : memref<4x25xf32, #tpu.memory_space<smem>>
      %c1_56 = arith.constant 1 : index
      %c11_57 = arith.constant 11 : index
      %46 = memref.load %arg2[%c1_56, %c11_57] : memref<4x25xf32, #tpu.memory_space<smem>>
      %c1_58 = arith.constant 1 : index
      %c12_59 = arith.constant 12 : index
      %47 = memref.load %arg2[%c1_58, %c12_59] : memref<4x25xf32, #tpu.memory_space<smem>>
      %c1_60 = arith.constant 1 : index
      %c13_61 = arith.constant 13 : index
      %48 = memref.load %arg2[%c1_60, %c13_61] : memref<4x25xf32, #tpu.memory_space<smem>>
      %c1_62 = arith.constant 1 : index
      %c14_63 = arith.constant 14 : index
      %49 = memref.load %arg2[%c1_62, %c14_63] : memref<4x25xf32, #tpu.memory_space<smem>>
      %c1_64 = arith.constant 1 : index
      %c15_65 = arith.constant 15 : index
      %50 = memref.load %arg2[%c1_64, %c15_65] : memref<4x25xf32, #tpu.memory_space<smem>>
      %c1_66 = arith.constant 1 : index
      %c16_67 = arith.constant 16 : index
      %51 = memref.load %arg2[%c1_66, %c16_67] : memref<4x25xf32, #tpu.memory_space<smem>>
      %c1_68 = arith.constant 1 : index
      %c17_69 = arith.constant 17 : index
      %52 = memref.load %arg2[%c1_68, %c17_69] : memref<4x25xf32, #tpu.memory_space<smem>>
      %c1_70 = arith.constant 1 : index
      %c18_71 = arith.constant 18 : index
      %53 = memref.load %arg2[%c1_70, %c18_71] : memref<4x25xf32, #tpu.memory_space<smem>>
      %c1_72 = arith.constant 1 : index
      %c19_73 = arith.constant 19 : index
      %54 = memref.load %arg2[%c1_72, %c19_73] : memref<4x25xf32, #tpu.memory_space<smem>>
      %c1_74 = arith.constant 1 : index
      %c20_75 = arith.constant 20 : index
      %55 = memref.load %arg2[%c1_74, %c20_75] : memref<4x25xf32, #tpu.memory_space<smem>>
      %c1_76 = arith.constant 1 : index
      %c21_77 = arith.constant 21 : index
      %56 = memref.load %arg2[%c1_76, %c21_77] : memref<4x25xf32, #tpu.memory_space<smem>>
      %c1_78 = arith.constant 1 : index
      %c22_79 = arith.constant 22 : index
      %57 = memref.load %arg2[%c1_78, %c22_79] : memref<4x25xf32, #tpu.memory_space<smem>>
      %c1_80 = arith.constant 1 : index
      %c23_81 = arith.constant 23 : index
      %58 = memref.load %arg2[%c1_80, %c23_81] : memref<4x25xf32, #tpu.memory_space<smem>>
      %c1_82 = arith.constant 1 : index
      %c24_83 = arith.constant 24 : index
      %59 = memref.load %arg2[%c1_82, %c24_83] : memref<4x25xf32, #tpu.memory_space<smem>>
      %c2_84 = arith.constant 2 : index
      %c0_85 = arith.constant 0 : index
      %60 = memref.load %arg2[%c2_84, %c0_85] : memref<4x25xf32, #tpu.memory_space<smem>>
      %c2_86 = arith.constant 2 : index
      %c1_87 = arith.constant 1 : index
      %61 = memref.load %arg2[%c2_86, %c1_87] : memref<4x25xf32, #tpu.memory_space<smem>>
      %c2_88 = arith.constant 2 : index
      %c2_89 = arith.constant 2 : index
      %62 = memref.load %arg2[%c2_88, %c2_89] : memref<4x25xf32, #tpu.memory_space<smem>>
      %c2_90 = arith.constant 2 : index
      %c3_91 = arith.constant 3 : index
      %63 = memref.load %arg2[%c2_90, %c3_91] : memref<4x25xf32, #tpu.memory_space<smem>>
      %c2_92 = arith.constant 2 : index
      %c4_93 = arith.constant 4 : index
      %64 = memref.load %arg2[%c2_92, %c4_93] : memref<4x25xf32, #tpu.memory_space<smem>>
      %c2_94 = arith.constant 2 : index
      %c5_95 = arith.constant 5 : index
      %65 = memref.load %arg2[%c2_94, %c5_95] : memref<4x25xf32, #tpu.memory_space<smem>>
      %c2_96 = arith.constant 2 : index
      %c6_97 = arith.constant 6 : index
      %66 = memref.load %arg2[%c2_96, %c6_97] : memref<4x25xf32, #tpu.memory_space<smem>>
      %c2_98 = arith.constant 2 : index
      %c7_99 = arith.constant 7 : index
      %67 = memref.load %arg2[%c2_98, %c7_99] : memref<4x25xf32, #tpu.memory_space<smem>>
      %c2_100 = arith.constant 2 : index
      %c8_101 = arith.constant 8 : index
      %68 = memref.load %arg2[%c2_100, %c8_101] : memref<4x25xf32, #tpu.memory_space<smem>>
      %c2_102 = arith.constant 2 : index
      %c9_103 = arith.constant 9 : index
      %69 = memref.load %arg2[%c2_102, %c9_103] : memref<4x25xf32, #tpu.memory_space<smem>>
      %c2_104 = arith.constant 2 : index
      %c10_105 = arith.constant 10 : index
      %70 = memref.load %arg2[%c2_104, %c10_105] : memref<4x25xf32, #tpu.memory_space<smem>>
      %c2_106 = arith.constant 2 : index
      %c11_107 = arith.constant 11 : index
      %71 = memref.load %arg2[%c2_106, %c11_107] : memref<4x25xf32, #tpu.memory_space<smem>>
      %c2_108 = arith.constant 2 : index
      %c12_109 = arith.constant 12 : index
      %72 = memref.load %arg2[%c2_108, %c12_109] : memref<4x25xf32, #tpu.memory_space<smem>>
      %c2_110 = arith.constant 2 : index
      %c13_111 = arith.constant 13 : index
      %73 = memref.load %arg2[%c2_110, %c13_111] : memref<4x25xf32, #tpu.memory_space<smem>>
      %c2_112 = arith.constant 2 : index
      %c14_113 = arith.constant 14 : index
      %74 = memref.load %arg2[%c2_112, %c14_113] : memref<4x25xf32, #tpu.memory_space<smem>>
      %c2_114 = arith.constant 2 : index
      %c15_115 = arith.constant 15 : index
      %75 = memref.load %arg2[%c2_114, %c15_115] : memref<4x25xf32, #tpu.memory_space<smem>>
      %c2_116 = arith.constant 2 : index
      %c16_117 = arith.constant 16 : index
      %76 = memref.load %arg2[%c2_116, %c16_117] : memref<4x25xf32, #tpu.memory_space<smem>>
      %c2_118 = arith.constant 2 : index
      %c17_119 = arith.constant 17 : index
      %77 = memref.load %arg2[%c2_118, %c17_119] : memref<4x25xf32, #tpu.memory_space<smem>>
      %c2_120 = arith.constant 2 : index
      %c18_121 = arith.constant 18 : index
      %78 = memref.load %arg2[%c2_120, %c18_121] : memref<4x25xf32, #tpu.memory_space<smem>>
      %c2_122 = arith.constant 2 : index
      %c19_123 = arith.constant 19 : index
      %79 = memref.load %arg2[%c2_122, %c19_123] : memref<4x25xf32, #tpu.memory_space<smem>>
      %c2_124 = arith.constant 2 : index
      %c20_125 = arith.constant 20 : index
      %80 = memref.load %arg2[%c2_124, %c20_125] : memref<4x25xf32, #tpu.memory_space<smem>>
      %c2_126 = arith.constant 2 : index
      %c21_127 = arith.constant 21 : index
      %81 = memref.load %arg2[%c2_126, %c21_127] : memref<4x25xf32, #tpu.memory_space<smem>>
      %c2_128 = arith.constant 2 : index
      %c22_129 = arith.constant 22 : index
      %82 = memref.load %arg2[%c2_128, %c22_129] : memref<4x25xf32, #tpu.memory_space<smem>>
      %c2_130 = arith.constant 2 : index
      %c23_131 = arith.constant 23 : index
      %83 = memref.load %arg2[%c2_130, %c23_131] : memref<4x25xf32, #tpu.memory_space<smem>>
      %c2_132 = arith.constant 2 : index
      %c24_133 = arith.constant 24 : index
      %84 = memref.load %arg2[%c2_132, %c24_133] : memref<4x25xf32, #tpu.memory_space<smem>>
      %c3_134 = arith.constant 3 : index
      %c0_135 = arith.constant 0 : index
      %85 = memref.load %arg2[%c3_134, %c0_135] : memref<4x25xf32, #tpu.memory_space<smem>>
      %c3_136 = arith.constant 3 : index
      %c1_137 = arith.constant 1 : index
      %86 = memref.load %arg2[%c3_136, %c1_137] : memref<4x25xf32, #tpu.memory_space<smem>>
      %c3_138 = arith.constant 3 : index
      %c2_139 = arith.constant 2 : index
      %87 = memref.load %arg2[%c3_138, %c2_139] : memref<4x25xf32, #tpu.memory_space<smem>>
      %c3_140 = arith.constant 3 : index
      %c3_141 = arith.constant 3 : index
      %88 = memref.load %arg2[%c3_140, %c3_141] : memref<4x25xf32, #tpu.memory_space<smem>>
      %c3_142 = arith.constant 3 : index
      %c4_143 = arith.constant 4 : index
      %89 = memref.load %arg2[%c3_142, %c4_143] : memref<4x25xf32, #tpu.memory_space<smem>>
      %c3_144 = arith.constant 3 : index
      %c5_145 = arith.constant 5 : index
      %90 = memref.load %arg2[%c3_144, %c5_145] : memref<4x25xf32, #tpu.memory_space<smem>>
      %c3_146 = arith.constant 3 : index
      %c6_147 = arith.constant 6 : index
      %91 = memref.load %arg2[%c3_146, %c6_147] : memref<4x25xf32, #tpu.memory_space<smem>>
      %c3_148 = arith.constant 3 : index
      %c7_149 = arith.constant 7 : index
      %92 = memref.load %arg2[%c3_148, %c7_149] : memref<4x25xf32, #tpu.memory_space<smem>>
      %c3_150 = arith.constant 3 : index
      %c8_151 = arith.constant 8 : index
      %93 = memref.load %arg2[%c3_150, %c8_151] : memref<4x25xf32, #tpu.memory_space<smem>>
      %c3_152 = arith.constant 3 : index
      %c9_153 = arith.constant 9 : index
      %94 = memref.load %arg2[%c3_152, %c9_153] : memref<4x25xf32, #tpu.memory_space<smem>>
      %c3_154 = arith.constant 3 : index
      %c10_155 = arith.constant 10 : index
      %95 = memref.load %arg2[%c3_154, %c10_155] : memref<4x25xf32, #tpu.memory_space<smem>>
      %c3_156 = arith.constant 3 : index
      %c11_157 = arith.constant 11 : index
      %96 = memref.load %arg2[%c3_156, %c11_157] : memref<4x25xf32, #tpu.memory_space<smem>>
      %c3_158 = arith.constant 3 : index
      %c12_159 = arith.constant 12 : index
      %97 = memref.load %arg2[%c3_158, %c12_159] : memref<4x25xf32, #tpu.memory_space<smem>>
      %c3_160 = arith.constant 3 : index
      %c13_161 = arith.constant 13 : index
      %98 = memref.load %arg2[%c3_160, %c13_161] : memref<4x25xf32, #tpu.memory_space<smem>>
      %c3_162 = arith.constant 3 : index
      %c14_163 = arith.constant 14 : index
      %99 = memref.load %arg2[%c3_162, %c14_163] : memref<4x25xf32, #tpu.memory_space<smem>>
      %c3_164 = arith.constant 3 : index
      %c15_165 = arith.constant 15 : index
      %100 = memref.load %arg2[%c3_164, %c15_165] : memref<4x25xf32, #tpu.memory_space<smem>>
      %c3_166 = arith.constant 3 : index
      %c16_167 = arith.constant 16 : index
      %101 = memref.load %arg2[%c3_166, %c16_167] : memref<4x25xf32, #tpu.memory_space<smem>>
      %c3_168 = arith.constant 3 : index
      %c17_169 = arith.constant 17 : index
      %102 = memref.load %arg2[%c3_168, %c17_169] : memref<4x25xf32, #tpu.memory_space<smem>>
      %c3_170 = arith.constant 3 : index
      %c18_171 = arith.constant 18 : index
      %103 = memref.load %arg2[%c3_170, %c18_171] : memref<4x25xf32, #tpu.memory_space<smem>>
      %c3_172 = arith.constant 3 : index
      %c19_173 = arith.constant 19 : index
      %104 = memref.load %arg2[%c3_172, %c19_173] : memref<4x25xf32, #tpu.memory_space<smem>>
      %c3_174 = arith.constant 3 : index
      %c20_175 = arith.constant 20 : index
      %105 = memref.load %arg2[%c3_174, %c20_175] : memref<4x25xf32, #tpu.memory_space<smem>>
      %c3_176 = arith.constant 3 : index
      %c21_177 = arith.constant 21 : index
      %106 = memref.load %arg2[%c3_176, %c21_177] : memref<4x25xf32, #tpu.memory_space<smem>>
      %c3_178 = arith.constant 3 : index
      %c22_179 = arith.constant 22 : index
      %107 = memref.load %arg2[%c3_178, %c22_179] : memref<4x25xf32, #tpu.memory_space<smem>>
      %c3_180 = arith.constant 3 : index
      %c23_181 = arith.constant 23 : index
      %108 = memref.load %arg2[%c3_180, %c23_181] : memref<4x25xf32, #tpu.memory_space<smem>>
      %c3_182 = arith.constant 3 : index
      %c24_183 = arith.constant 24 : index
      %109 = memref.load %arg2[%c3_182, %c24_183] : memref<4x25xf32, #tpu.memory_space<smem>>
      %c0_184 = arith.constant 0 : index
      %110 = memref.load %arg3[%c0_184] : memref<4xf32, #tpu.memory_space<smem>>
      %c1_185 = arith.constant 1 : index
      %111 = memref.load %arg3[%c1_185] : memref<4xf32, #tpu.memory_space<smem>>
      %c2_186 = arith.constant 2 : index
      %112 = memref.load %arg3[%c2_186] : memref<4xf32, #tpu.memory_space<smem>>
      %c3_187 = arith.constant 3 : index
      %113 = memref.load %arg3[%c3_187] : memref<4xf32, #tpu.memory_space<smem>>
      %c0_188 = arith.constant 0 : index
      %c0_189 = arith.constant 0 : index
      %c0_190 = arith.constant 0 : index
      %114 = vector.load %arg4[%c0_188, %c0_189, %c0_190] : memref<25x8x256xf32, #tpu.memory_space<vmem>>, vector<1x8x256xf32>
      %115 = vector.shape_cast %114 : vector<1x8x256xf32> to vector<8x256xf32>
      %116 = vector.broadcast %10 : f32 to vector<8x256xf32>
      %117 = arith.mulf %116, %115 : vector<8x256xf32>
      %c1_191 = arith.constant 1 : index
      %c0_192 = arith.constant 0 : index
      %c0_193 = arith.constant 0 : index
      %118 = vector.load %arg4[%c1_191, %c0_192, %c0_193] : memref<25x8x256xf32, #tpu.memory_space<vmem>>, vector<1x8x256xf32>
      %119 = vector.shape_cast %118 : vector<1x8x256xf32> to vector<8x256xf32>
      %120 = vector.broadcast %11 : f32 to vector<8x256xf32>
      %121 = arith.mulf %120, %119 : vector<8x256xf32>
      %122 = arith.addf %117, %121 : vector<8x256xf32>
      %c2_194 = arith.constant 2 : index
      %c0_195 = arith.constant 0 : index
      %c0_196 = arith.constant 0 : index
      %123 = vector.load %arg4[%c2_194, %c0_195, %c0_196] : memref<25x8x256xf32, #tpu.memory_space<vmem>>, vector<1x8x256xf32>
      %124 = vector.shape_cast %123 : vector<1x8x256xf32> to vector<8x256xf32>
      %125 = vector.broadcast %12 : f32 to vector<8x256xf32>
      %126 = arith.mulf %125, %124 : vector<8x256xf32>
      %127 = arith.addf %122, %126 : vector<8x256xf32>
      %c3_197 = arith.constant 3 : index
      %c0_198 = arith.constant 0 : index
      %c0_199 = arith.constant 0 : index
      %128 = vector.load %arg4[%c3_197, %c0_198, %c0_199] : memref<25x8x256xf32, #tpu.memory_space<vmem>>, vector<1x8x256xf32>
      %129 = vector.shape_cast %128 : vector<1x8x256xf32> to vector<8x256xf32>
      %130 = vector.broadcast %13 : f32 to vector<8x256xf32>
      %131 = arith.mulf %130, %129 : vector<8x256xf32>
      %132 = arith.addf %127, %131 : vector<8x256xf32>
      %c4_200 = arith.constant 4 : index
      %c0_201 = arith.constant 0 : index
      %c0_202 = arith.constant 0 : index
      %133 = vector.load %arg4[%c4_200, %c0_201, %c0_202] : memref<25x8x256xf32, #tpu.memory_space<vmem>>, vector<1x8x256xf32>
      %134 = vector.shape_cast %133 : vector<1x8x256xf32> to vector<8x256xf32>
      %135 = vector.broadcast %14 : f32 to vector<8x256xf32>
      %136 = arith.mulf %135, %134 : vector<8x256xf32>
      %137 = arith.addf %132, %136 : vector<8x256xf32>
      %c5_203 = arith.constant 5 : index
      %c0_204 = arith.constant 0 : index
      %c0_205 = arith.constant 0 : index
      %138 = vector.load %arg4[%c5_203, %c0_204, %c0_205] : memref<25x8x256xf32, #tpu.memory_space<vmem>>, vector<1x8x256xf32>
      %139 = vector.shape_cast %138 : vector<1x8x256xf32> to vector<8x256xf32>
      %140 = vector.broadcast %15 : f32 to vector<8x256xf32>
      %141 = arith.mulf %140, %139 : vector<8x256xf32>
      %142 = arith.addf %137, %141 : vector<8x256xf32>
      %c6_206 = arith.constant 6 : index
      %c0_207 = arith.constant 0 : index
      %c0_208 = arith.constant 0 : index
      %143 = vector.load %arg4[%c6_206, %c0_207, %c0_208] : memref<25x8x256xf32, #tpu.memory_space<vmem>>, vector<1x8x256xf32>
      %144 = vector.shape_cast %143 : vector<1x8x256xf32> to vector<8x256xf32>
      %145 = vector.broadcast %16 : f32 to vector<8x256xf32>
      %146 = arith.mulf %145, %144 : vector<8x256xf32>
      %147 = arith.addf %142, %146 : vector<8x256xf32>
      %c7_209 = arith.constant 7 : index
      %c0_210 = arith.constant 0 : index
      %c0_211 = arith.constant 0 : index
      %148 = vector.load %arg4[%c7_209, %c0_210, %c0_211] : memref<25x8x256xf32, #tpu.memory_space<vmem>>, vector<1x8x256xf32>
      %149 = vector.shape_cast %148 : vector<1x8x256xf32> to vector<8x256xf32>
      %150 = vector.broadcast %17 : f32 to vector<8x256xf32>
      %151 = arith.mulf %150, %149 : vector<8x256xf32>
      %152 = arith.addf %147, %151 : vector<8x256xf32>
      %c8_212 = arith.constant 8 : index
      %c0_213 = arith.constant 0 : index
      %c0_214 = arith.constant 0 : index
      %153 = vector.load %arg4[%c8_212, %c0_213, %c0_214] : memref<25x8x256xf32, #tpu.memory_space<vmem>>, vector<1x8x256xf32>
      %154 = vector.shape_cast %153 : vector<1x8x256xf32> to vector<8x256xf32>
      %155 = vector.broadcast %18 : f32 to vector<8x256xf32>
      %156 = arith.mulf %155, %154 : vector<8x256xf32>
      %157 = arith.addf %152, %156 : vector<8x256xf32>
      %c9_215 = arith.constant 9 : index
      %c0_216 = arith.constant 0 : index
      %c0_217 = arith.constant 0 : index
      %158 = vector.load %arg4[%c9_215, %c0_216, %c0_217] : memref<25x8x256xf32, #tpu.memory_space<vmem>>, vector<1x8x256xf32>
      %159 = vector.shape_cast %158 : vector<1x8x256xf32> to vector<8x256xf32>
      %160 = vector.broadcast %19 : f32 to vector<8x256xf32>
      %161 = arith.mulf %160, %159 : vector<8x256xf32>
      %162 = arith.addf %157, %161 : vector<8x256xf32>
      %c10_218 = arith.constant 10 : index
      %c0_219 = arith.constant 0 : index
      %c0_220 = arith.constant 0 : index
      %163 = vector.load %arg4[%c10_218, %c0_219, %c0_220] : memref<25x8x256xf32, #tpu.memory_space<vmem>>, vector<1x8x256xf32>
      %164 = vector.shape_cast %163 : vector<1x8x256xf32> to vector<8x256xf32>
      %165 = vector.broadcast %20 : f32 to vector<8x256xf32>
      %166 = arith.mulf %165, %164 : vector<8x256xf32>
      %167 = arith.addf %162, %166 : vector<8x256xf32>
      %c11_221 = arith.constant 11 : index
      %c0_222 = arith.constant 0 : index
      %c0_223 = arith.constant 0 : index
      %168 = vector.load %arg4[%c11_221, %c0_222, %c0_223] : memref<25x8x256xf32, #tpu.memory_space<vmem>>, vector<1x8x256xf32>
      %169 = vector.shape_cast %168 : vector<1x8x256xf32> to vector<8x256xf32>
      %170 = vector.broadcast %21 : f32 to vector<8x256xf32>
      %171 = arith.mulf %170, %169 : vector<8x256xf32>
      %172 = arith.addf %167, %171 : vector<8x256xf32>
      %c12_224 = arith.constant 12 : index
      %c0_225 = arith.constant 0 : index
      %c0_226 = arith.constant 0 : index
      %173 = vector.load %arg4[%c12_224, %c0_225, %c0_226] : memref<25x8x256xf32, #tpu.memory_space<vmem>>, vector<1x8x256xf32>
      %174 = vector.shape_cast %173 : vector<1x8x256xf32> to vector<8x256xf32>
      %175 = vector.broadcast %22 : f32 to vector<8x256xf32>
      %176 = arith.mulf %175, %174 : vector<8x256xf32>
      %177 = arith.addf %172, %176 : vector<8x256xf32>
      %c13_227 = arith.constant 13 : index
      %c0_228 = arith.constant 0 : index
      %c0_229 = arith.constant 0 : index
      %178 = vector.load %arg4[%c13_227, %c0_228, %c0_229] : memref<25x8x256xf32, #tpu.memory_space<vmem>>, vector<1x8x256xf32>
      %179 = vector.shape_cast %178 : vector<1x8x256xf32> to vector<8x256xf32>
      %180 = vector.broadcast %23 : f32 to vector<8x256xf32>
      %181 = arith.mulf %180, %179 : vector<8x256xf32>
      %182 = arith.addf %177, %181 : vector<8x256xf32>
      %c14_230 = arith.constant 14 : index
      %c0_231 = arith.constant 0 : index
      %c0_232 = arith.constant 0 : index
      %183 = vector.load %arg4[%c14_230, %c0_231, %c0_232] : memref<25x8x256xf32, #tpu.memory_space<vmem>>, vector<1x8x256xf32>
      %184 = vector.shape_cast %183 : vector<1x8x256xf32> to vector<8x256xf32>
      %185 = vector.broadcast %24 : f32 to vector<8x256xf32>
      %186 = arith.mulf %185, %184 : vector<8x256xf32>
      %187 = arith.addf %182, %186 : vector<8x256xf32>
      %c15_233 = arith.constant 15 : index
      %c0_234 = arith.constant 0 : index
      %c0_235 = arith.constant 0 : index
      %188 = vector.load %arg4[%c15_233, %c0_234, %c0_235] : memref<25x8x256xf32, #tpu.memory_space<vmem>>, vector<1x8x256xf32>
      %189 = vector.shape_cast %188 : vector<1x8x256xf32> to vector<8x256xf32>
      %190 = vector.broadcast %25 : f32 to vector<8x256xf32>
      %191 = arith.mulf %190, %189 : vector<8x256xf32>
      %192 = arith.addf %187, %191 : vector<8x256xf32>
      %c16_236 = arith.constant 16 : index
      %c0_237 = arith.constant 0 : index
      %c0_238 = arith.constant 0 : index
      %193 = vector.load %arg4[%c16_236, %c0_237, %c0_238] : memref<25x8x256xf32, #tpu.memory_space<vmem>>, vector<1x8x256xf32>
      %194 = vector.shape_cast %193 : vector<1x8x256xf32> to vector<8x256xf32>
      %195 = vector.broadcast %26 : f32 to vector<8x256xf32>
      %196 = arith.mulf %195, %194 : vector<8x256xf32>
      %197 = arith.addf %192, %196 : vector<8x256xf32>
      %c17_239 = arith.constant 17 : index
      %c0_240 = arith.constant 0 : index
      %c0_241 = arith.constant 0 : index
      %198 = vector.load %arg4[%c17_239, %c0_240, %c0_241] : memref<25x8x256xf32, #tpu.memory_space<vmem>>, vector<1x8x256xf32>
      %199 = vector.shape_cast %198 : vector<1x8x256xf32> to vector<8x256xf32>
      %200 = vector.broadcast %27 : f32 to vector<8x256xf32>
      %201 = arith.mulf %200, %199 : vector<8x256xf32>
      %202 = arith.addf %197, %201 : vector<8x256xf32>
      %c18_242 = arith.constant 18 : index
      %c0_243 = arith.constant 0 : index
      %c0_244 = arith.constant 0 : index
      %203 = vector.load %arg4[%c18_242, %c0_243, %c0_244] : memref<25x8x256xf32, #tpu.memory_space<vmem>>, vector<1x8x256xf32>
      %204 = vector.shape_cast %203 : vector<1x8x256xf32> to vector<8x256xf32>
      %205 = vector.broadcast %28 : f32 to vector<8x256xf32>
      %206 = arith.mulf %205, %204 : vector<8x256xf32>
      %207 = arith.addf %202, %206 : vector<8x256xf32>
      %c19_245 = arith.constant 19 : index
      %c0_246 = arith.constant 0 : index
      %c0_247 = arith.constant 0 : index
      %208 = vector.load %arg4[%c19_245, %c0_246, %c0_247] : memref<25x8x256xf32, #tpu.memory_space<vmem>>, vector<1x8x256xf32>
      %209 = vector.shape_cast %208 : vector<1x8x256xf32> to vector<8x256xf32>
      %210 = vector.broadcast %29 : f32 to vector<8x256xf32>
      %211 = arith.mulf %210, %209 : vector<8x256xf32>
      %212 = arith.addf %207, %211 : vector<8x256xf32>
      %c20_248 = arith.constant 20 : index
      %c0_249 = arith.constant 0 : index
      %c0_250 = arith.constant 0 : index
      %213 = vector.load %arg4[%c20_248, %c0_249, %c0_250] : memref<25x8x256xf32, #tpu.memory_space<vmem>>, vector<1x8x256xf32>
      %214 = vector.shape_cast %213 : vector<1x8x256xf32> to vector<8x256xf32>
      %215 = vector.broadcast %30 : f32 to vector<8x256xf32>
      %216 = arith.mulf %215, %214 : vector<8x256xf32>
      %217 = arith.addf %212, %216 : vector<8x256xf32>
      %c21_251 = arith.constant 21 : index
      %c0_252 = arith.constant 0 : index
      %c0_253 = arith.constant 0 : index
      %218 = vector.load %arg4[%c21_251, %c0_252, %c0_253] : memref<25x8x256xf32, #tpu.memory_space<vmem>>, vector<1x8x256xf32>
      %219 = vector.shape_cast %218 : vector<1x8x256xf32> to vector<8x256xf32>
      %220 = vector.broadcast %31 : f32 to vector<8x256xf32>
      %221 = arith.mulf %220, %219 : vector<8x256xf32>
      %222 = arith.addf %217, %221 : vector<8x256xf32>
      %c22_254 = arith.constant 22 : index
      %c0_255 = arith.constant 0 : index
      %c0_256 = arith.constant 0 : index
      %223 = vector.load %arg4[%c22_254, %c0_255, %c0_256] : memref<25x8x256xf32, #tpu.memory_space<vmem>>, vector<1x8x256xf32>
      %224 = vector.shape_cast %223 : vector<1x8x256xf32> to vector<8x256xf32>
      %225 = vector.broadcast %32 : f32 to vector<8x256xf32>
      %226 = arith.mulf %225, %224 : vector<8x256xf32>
      %227 = arith.addf %222, %226 : vector<8x256xf32>
      %c23_257 = arith.constant 23 : index
      %c0_258 = arith.constant 0 : index
      %c0_259 = arith.constant 0 : index
      %228 = vector.load %arg4[%c23_257, %c0_258, %c0_259] : memref<25x8x256xf32, #tpu.memory_space<vmem>>, vector<1x8x256xf32>
      %229 = vector.shape_cast %228 : vector<1x8x256xf32> to vector<8x256xf32>
      %230 = vector.broadcast %33 : f32 to vector<8x256xf32>
      %231 = arith.mulf %230, %229 : vector<8x256xf32>
      %232 = arith.addf %227, %231 : vector<8x256xf32>
      %c24_260 = arith.constant 24 : index
      %c0_261 = arith.constant 0 : index
      %c0_262 = arith.constant 0 : index
      %233 = vector.load %arg4[%c24_260, %c0_261, %c0_262] : memref<25x8x256xf32, #tpu.memory_space<vmem>>, vector<1x8x256xf32>
      %234 = vector.shape_cast %233 : vector<1x8x256xf32> to vector<8x256xf32>
      %235 = vector.broadcast %34 : f32 to vector<8x256xf32>
      %236 = arith.mulf %235, %234 : vector<8x256xf32>
      %237 = arith.addf %232, %236 : vector<8x256xf32>
      %238 = vector.broadcast %110 : f32 to vector<8x256xf32>
      %239 = arith.addf %237, %238 : vector<8x256xf32>
      %cst_263 = arith.constant 0.000000e+00 : f32
      %240 = vector.broadcast %cst_263 : f32 to vector<8x256xf32>
      %241 = arith.cmpf oge, %239, %240 : vector<8x256xf32>
      %cst_264 = arith.constant 0.00999999977 : f32
      %242 = vector.broadcast %cst_264 : f32 to vector<8x256xf32>
      %243 = arith.mulf %242, %239 : vector<8x256xf32>
      %244 = arith.select %241, %239, %243 : vector<8x256xi1>, vector<8x256xf32>
      %c0_265 = arith.constant 0 : index
      %c0_266 = arith.constant 0 : index
      %245 = vector.load %arg8[%c0_265, %c0_266] : memref<8x1024xf32, #tpu.memory_space<vmem>>, vector<8x256xf32>
      tpu.vector_store %arg8[%c0_265, %c0_266], %244 {strides = array<i32>} : memref<8x1024xf32, #tpu.memory_space<vmem>>, vector<8x256xf32>,
      %c0_267 = arith.constant 0 : index
      %c0_268 = arith.constant 0 : index
      %c0_269 = arith.constant 0 : index
      %246 = vector.load %arg4[%c0_267, %c0_268, %c0_269] : memref<25x8x256xf32, #tpu.memory_space<vmem>>, vector<1x8x256xf32>
      %247 = vector.shape_cast %246 : vector<1x8x256xf32> to vector<8x256xf32>
      %248 = vector.broadcast %35 : f32 to vector<8x256xf32>
      %249 = arith.mulf %248, %247 : vector<8x256xf32>
      %c1_270 = arith.constant 1 : index
      %c0_271 = arith.constant 0 : index
      %c0_272 = arith.constant 0 : index
      %250 = vector.load %arg4[%c1_270, %c0_271, %c0_272] : memref<25x8x256xf32, #tpu.memory_space<vmem>>, vector<1x8x256xf32>
      %251 = vector.shape_cast %250 : vector<1x8x256xf32> to vector<8x256xf32>
      %252 = vector.broadcast %36 : f32 to vector<8x256xf32>
      %253 = arith.mulf %252, %251 : vector<8x256xf32>
      %254 = arith.addf %249, %253 : vector<8x256xf32>
      %c2_273 = arith.constant 2 : index
      %c0_274 = arith.constant 0 : index
      %c0_275 = arith.constant 0 : index
      %255 = vector.load %arg4[%c2_273, %c0_274, %c0_275] : memref<25x8x256xf32, #tpu.memory_space<vmem>>, vector<1x8x256xf32>
      %256 = vector.shape_cast %255 : vector<1x8x256xf32> to vector<8x256xf32>
      %257 = vector.broadcast %37 : f32 to vector<8x256xf32>
      %258 = arith.mulf %257, %256 : vector<8x256xf32>
      %259 = arith.addf %254, %258 : vector<8x256xf32>
      %c3_276 = arith.constant 3 : index
      %c0_277 = arith.constant 0 : index
      %c0_278 = arith.constant 0 : index
      %260 = vector.load %arg4[%c3_276, %c0_277, %c0_278] : memref<25x8x256xf32, #tpu.memory_space<vmem>>, vector<1x8x256xf32>
      %261 = vector.shape_cast %260 : vector<1x8x256xf32> to vector<8x256xf32>
      %262 = vector.broadcast %38 : f32 to vector<8x256xf32>
      %263 = arith.mulf %262, %261 : vector<8x256xf32>
      %264 = arith.addf %259, %263 : vector<8x256xf32>
      %c4_279 = arith.constant 4 : index
      %c0_280 = arith.constant 0 : index
      %c0_281 = arith.constant 0 : index
      %265 = vector.load %arg4[%c4_279, %c0_280, %c0_281] : memref<25x8x256xf32, #tpu.memory_space<vmem>>, vector<1x8x256xf32>
      %266 = vector.shape_cast %265 : vector<1x8x256xf32> to vector<8x256xf32>
      %267 = vector.broadcast %39 : f32 to vector<8x256xf32>
      %268 = arith.mulf %267, %266 : vector<8x256xf32>
      %269 = arith.addf %264, %268 : vector<8x256xf32>
      %c5_282 = arith.constant 5 : index
      %c0_283 = arith.constant 0 : index
      %c0_284 = arith.constant 0 : index
      %270 = vector.load %arg4[%c5_282, %c0_283, %c0_284] : memref<25x8x256xf32, #tpu.memory_space<vmem>>, vector<1x8x256xf32>
      %271 = vector.shape_cast %270 : vector<1x8x256xf32> to vector<8x256xf32>
      %272 = vector.broadcast %40 : f32 to vector<8x256xf32>
      %273 = arith.mulf %272, %271 : vector<8x256xf32>
      %274 = arith.addf %269, %273 : vector<8x256xf32>
      %c6_285 = arith.constant 6 : index
      %c0_286 = arith.constant 0 : index
      %c0_287 = arith.constant 0 : index
      %275 = vector.load %arg4[%c6_285, %c0_286, %c0_287] : memref<25x8x256xf32, #tpu.memory_space<vmem>>, vector<1x8x256xf32>
      %276 = vector.shape_cast %275 : vector<1x8x256xf32> to vector<8x256xf32>
      %277 = vector.broadcast %41 : f32 to vector<8x256xf32>
      %278 = arith.mulf %277, %276 : vector<8x256xf32>
      %279 = arith.addf %274, %278 : vector<8x256xf32>
      %c7_288 = arith.constant 7 : index
      %c0_289 = arith.constant 0 : index
      %c0_290 = arith.constant 0 : index
      %280 = vector.load %arg4[%c7_288, %c0_289, %c0_290] : memref<25x8x256xf32, #tpu.memory_space<vmem>>, vector<1x8x256xf32>
      %281 = vector.shape_cast %280 : vector<1x8x256xf32> to vector<8x256xf32>
      %282 = vector.broadcast %42 : f32 to vector<8x256xf32>
      %283 = arith.mulf %282, %281 : vector<8x256xf32>
      %284 = arith.addf %279, %283 : vector<8x256xf32>
      %c8_291 = arith.constant 8 : index
      %c0_292 = arith.constant 0 : index
      %c0_293 = arith.constant 0 : index
      %285 = vector.load %arg4[%c8_291, %c0_292, %c0_293] : memref<25x8x256xf32, #tpu.memory_space<vmem>>, vector<1x8x256xf32>
      %286 = vector.shape_cast %285 : vector<1x8x256xf32> to vector<8x256xf32>
      %287 = vector.broadcast %43 : f32 to vector<8x256xf32>
      %288 = arith.mulf %287, %286 : vector<8x256xf32>
      %289 = arith.addf %284, %288 : vector<8x256xf32>
      %c9_294 = arith.constant 9 : index
      %c0_295 = arith.constant 0 : index
      %c0_296 = arith.constant 0 : index
      %290 = vector.load %arg4[%c9_294, %c0_295, %c0_296] : memref<25x8x256xf32, #tpu.memory_space<vmem>>, vector<1x8x256xf32>
      %291 = vector.shape_cast %290 : vector<1x8x256xf32> to vector<8x256xf32>
      %292 = vector.broadcast %44 : f32 to vector<8x256xf32>
      %293 = arith.mulf %292, %291 : vector<8x256xf32>
      %294 = arith.addf %289, %293 : vector<8x256xf32>
      %c10_297 = arith.constant 10 : index
      %c0_298 = arith.constant 0 : index
      %c0_299 = arith.constant 0 : index
      %295 = vector.load %arg4[%c10_297, %c0_298, %c0_299] : memref<25x8x256xf32, #tpu.memory_space<vmem>>, vector<1x8x256xf32>
      %296 = vector.shape_cast %295 : vector<1x8x256xf32> to vector<8x256xf32>
      %297 = vector.broadcast %45 : f32 to vector<8x256xf32>
      %298 = arith.mulf %297, %296 : vector<8x256xf32>
      %299 = arith.addf %294, %298 : vector<8x256xf32>
      %c11_300 = arith.constant 11 : index
      %c0_301 = arith.constant 0 : index
      %c0_302 = arith.constant 0 : index
      %300 = vector.load %arg4[%c11_300, %c0_301, %c0_302] : memref<25x8x256xf32, #tpu.memory_space<vmem>>, vector<1x8x256xf32>
      %301 = vector.shape_cast %300 : vector<1x8x256xf32> to vector<8x256xf32>
      %302 = vector.broadcast %46 : f32 to vector<8x256xf32>
      %303 = arith.mulf %302, %301 : vector<8x256xf32>
      %304 = arith.addf %299, %303 : vector<8x256xf32>
      %c12_303 = arith.constant 12 : index
      %c0_304 = arith.constant 0 : index
      %c0_305 = arith.constant 0 : index
      %305 = vector.load %arg4[%c12_303, %c0_304, %c0_305] : memref<25x8x256xf32, #tpu.memory_space<vmem>>, vector<1x8x256xf32>
      %306 = vector.shape_cast %305 : vector<1x8x256xf32> to vector<8x256xf32>
      %307 = vector.broadcast %47 : f32 to vector<8x256xf32>
      %308 = arith.mulf %307, %306 : vector<8x256xf32>
      %309 = arith.addf %304, %308 : vector<8x256xf32>
      %c13_306 = arith.constant 13 : index
      %c0_307 = arith.constant 0 : index
      %c0_308 = arith.constant 0 : index
      %310 = vector.load %arg4[%c13_306, %c0_307, %c0_308] : memref<25x8x256xf32, #tpu.memory_space<vmem>>, vector<1x8x256xf32>
      %311 = vector.shape_cast %310 : vector<1x8x256xf32> to vector<8x256xf32>
      %312 = vector.broadcast %48 : f32 to vector<8x256xf32>
      %313 = arith.mulf %312, %311 : vector<8x256xf32>
      %314 = arith.addf %309, %313 : vector<8x256xf32>
      %c14_309 = arith.constant 14 : index
      %c0_310 = arith.constant 0 : index
      %c0_311 = arith.constant 0 : index
      %315 = vector.load %arg4[%c14_309, %c0_310, %c0_311] : memref<25x8x256xf32, #tpu.memory_space<vmem>>, vector<1x8x256xf32>
      %316 = vector.shape_cast %315 : vector<1x8x256xf32> to vector<8x256xf32>
      %317 = vector.broadcast %49 : f32 to vector<8x256xf32>
      %318 = arith.mulf %317, %316 : vector<8x256xf32>
      %319 = arith.addf %314, %318 : vector<8x256xf32>
      %c15_312 = arith.constant 15 : index
      %c0_313 = arith.constant 0 : index
      %c0_314 = arith.constant 0 : index
      %320 = vector.load %arg4[%c15_312, %c0_313, %c0_314] : memref<25x8x256xf32, #tpu.memory_space<vmem>>, vector<1x8x256xf32>
      %321 = vector.shape_cast %320 : vector<1x8x256xf32> to vector<8x256xf32>
      %322 = vector.broadcast %50 : f32 to vector<8x256xf32>
      %323 = arith.mulf %322, %321 : vector<8x256xf32>
      %324 = arith.addf %319, %323 : vector<8x256xf32>
      %c16_315 = arith.constant 16 : index
      %c0_316 = arith.constant 0 : index
      %c0_317 = arith.constant 0 : index
      %325 = vector.load %arg4[%c16_315, %c0_316, %c0_317] : memref<25x8x256xf32, #tpu.memory_space<vmem>>, vector<1x8x256xf32>
      %326 = vector.shape_cast %325 : vector<1x8x256xf32> to vector<8x256xf32>
      %327 = vector.broadcast %51 : f32 to vector<8x256xf32>
      %328 = arith.mulf %327, %326 : vector<8x256xf32>
      %329 = arith.addf %324, %328 : vector<8x256xf32>
      %c17_318 = arith.constant 17 : index
      %c0_319 = arith.constant 0 : index
      %c0_320 = arith.constant 0 : index
      %330 = vector.load %arg4[%c17_318, %c0_319, %c0_320] : memref<25x8x256xf32, #tpu.memory_space<vmem>>, vector<1x8x256xf32>
      %331 = vector.shape_cast %330 : vector<1x8x256xf32> to vector<8x256xf32>
      %332 = vector.broadcast %52 : f32 to vector<8x256xf32>
      %333 = arith.mulf %332, %331 : vector<8x256xf32>
      %334 = arith.addf %329, %333 : vector<8x256xf32>
      %c18_321 = arith.constant 18 : index
      %c0_322 = arith.constant 0 : index
      %c0_323 = arith.constant 0 : index
      %335 = vector.load %arg4[%c18_321, %c0_322, %c0_323] : memref<25x8x256xf32, #tpu.memory_space<vmem>>, vector<1x8x256xf32>
      %336 = vector.shape_cast %335 : vector<1x8x256xf32> to vector<8x256xf32>
      %337 = vector.broadcast %53 : f32 to vector<8x256xf32>
      %338 = arith.mulf %337, %336 : vector<8x256xf32>
      %339 = arith.addf %334, %338 : vector<8x256xf32>
      %c19_324 = arith.constant 19 : index
      %c0_325 = arith.constant 0 : index
      %c0_326 = arith.constant 0 : index
      %340 = vector.load %arg4[%c19_324, %c0_325, %c0_326] : memref<25x8x256xf32, #tpu.memory_space<vmem>>, vector<1x8x256xf32>
      %341 = vector.shape_cast %340 : vector<1x8x256xf32> to vector<8x256xf32>
      %342 = vector.broadcast %54 : f32 to vector<8x256xf32>
      %343 = arith.mulf %342, %341 : vector<8x256xf32>
      %344 = arith.addf %339, %343 : vector<8x256xf32>
      %c20_327 = arith.constant 20 : index
      %c0_328 = arith.constant 0 : index
      %c0_329 = arith.constant 0 : index
      %345 = vector.load %arg4[%c20_327, %c0_328, %c0_329] : memref<25x8x256xf32, #tpu.memory_space<vmem>>, vector<1x8x256xf32>
      %346 = vector.shape_cast %345 : vector<1x8x256xf32> to vector<8x256xf32>
      %347 = vector.broadcast %55 : f32 to vector<8x256xf32>
      %348 = arith.mulf %347, %346 : vector<8x256xf32>
      %349 = arith.addf %344, %348 : vector<8x256xf32>
      %c21_330 = arith.constant 21 : index
      %c0_331 = arith.constant 0 : index
      %c0_332 = arith.constant 0 : index
      %350 = vector.load %arg4[%c21_330, %c0_331, %c0_332] : memref<25x8x256xf32, #tpu.memory_space<vmem>>, vector<1x8x256xf32>
      %351 = vector.shape_cast %350 : vector<1x8x256xf32> to vector<8x256xf32>
      %352 = vector.broadcast %56 : f32 to vector<8x256xf32>
      %353 = arith.mulf %352, %351 : vector<8x256xf32>
      %354 = arith.addf %349, %353 : vector<8x256xf32>
      %c22_333 = arith.constant 22 : index
      %c0_334 = arith.constant 0 : index
      %c0_335 = arith.constant 0 : index
      %355 = vector.load %arg4[%c22_333, %c0_334, %c0_335] : memref<25x8x256xf32, #tpu.memory_space<vmem>>, vector<1x8x256xf32>
      %356 = vector.shape_cast %355 : vector<1x8x256xf32> to vector<8x256xf32>
      %357 = vector.broadcast %57 : f32 to vector<8x256xf32>
      %358 = arith.mulf %357, %356 : vector<8x256xf32>
      %359 = arith.addf %354, %358 : vector<8x256xf32>
      %c23_336 = arith.constant 23 : index
      %c0_337 = arith.constant 0 : index
      %c0_338 = arith.constant 0 : index
      %360 = vector.load %arg4[%c23_336, %c0_337, %c0_338] : memref<25x8x256xf32, #tpu.memory_space<vmem>>, vector<1x8x256xf32>
      %361 = vector.shape_cast %360 : vector<1x8x256xf32> to vector<8x256xf32>
      %362 = vector.broadcast %58 : f32 to vector<8x256xf32>
      %363 = arith.mulf %362, %361 : vector<8x256xf32>
      %364 = arith.addf %359, %363 : vector<8x256xf32>
      %c24_339 = arith.constant 24 : index
      %c0_340 = arith.constant 0 : index
      %c0_341 = arith.constant 0 : index
      %365 = vector.load %arg4[%c24_339, %c0_340, %c0_341] : memref<25x8x256xf32, #tpu.memory_space<vmem>>, vector<1x8x256xf32>
      %366 = vector.shape_cast %365 : vector<1x8x256xf32> to vector<8x256xf32>
      %367 = vector.broadcast %59 : f32 to vector<8x256xf32>
      %368 = arith.mulf %367, %366 : vector<8x256xf32>
      %369 = arith.addf %364, %368 : vector<8x256xf32>
      %370 = vector.broadcast %111 : f32 to vector<8x256xf32>
      %371 = arith.addf %369, %370 : vector<8x256xf32>
      %cst_342 = arith.constant 0.000000e+00 : f32
      %372 = vector.broadcast %cst_342 : f32 to vector<8x256xf32>
      %373 = arith.cmpf oge, %371, %372 : vector<8x256xf32>
      %cst_343 = arith.constant 0.00999999977 : f32
      %374 = vector.broadcast %cst_343 : f32 to vector<8x256xf32>
      %375 = arith.mulf %374, %371 : vector<8x256xf32>
      %376 = arith.select %373, %371, %375 : vector<8x256xi1>, vector<8x256xf32>
      %c0_344 = arith.constant 0 : index
      %c256 = arith.constant 256 : index
      %377 = vector.load %arg8[%c0_344, %c256] : memref<8x1024xf32, #tpu.memory_space<vmem>>, vector<8x256xf32>
      tpu.vector_store %arg8[%c0_344, %c256], %376 {strides = array<i32>} : memref<8x1024xf32, #tpu.memory_space<vmem>>, vector<8x256xf32>,
      %c0_345 = arith.constant 0 : index
      %c0_346 = arith.constant 0 : index
      %c0_347 = arith.constant 0 : index
      %378 = vector.load %arg4[%c0_345, %c0_346, %c0_347] : memref<25x8x256xf32, #tpu.memory_space<vmem>>, vector<1x8x256xf32>
      %379 = vector.shape_cast %378 : vector<1x8x256xf32> to vector<8x256xf32>
      %380 = vector.broadcast %60 : f32 to vector<8x256xf32>
      %381 = arith.mulf %380, %379 : vector<8x256xf32>
      %c1_348 = arith.constant 1 : index
      %c0_349 = arith.constant 0 : index
      %c0_350 = arith.constant 0 : index
      %382 = vector.load %arg4[%c1_348, %c0_349, %c0_350] : memref<25x8x256xf32, #tpu.memory_space<vmem>>, vector<1x8x256xf32>
      %383 = vector.shape_cast %382 : vector<1x8x256xf32> to vector<8x256xf32>
      %384 = vector.broadcast %61 : f32 to vector<8x256xf32>
      %385 = arith.mulf %384, %383 : vector<8x256xf32>
      %386 = arith.addf %381, %385 : vector<8x256xf32>
      %c2_351 = arith.constant 2 : index
      %c0_352 = arith.constant 0 : index
      %c0_353 = arith.constant 0 : index
      %387 = vector.load %arg4[%c2_351, %c0_352, %c0_353] : memref<25x8x256xf32, #tpu.memory_space<vmem>>, vector<1x8x256xf32>
      %388 = vector.shape_cast %387 : vector<1x8x256xf32> to vector<8x256xf32>
      %389 = vector.broadcast %62 : f32 to vector<8x256xf32>
      %390 = arith.mulf %389, %388 : vector<8x256xf32>
      %391 = arith.addf %386, %390 : vector<8x256xf32>
      %c3_354 = arith.constant 3 : index
      %c0_355 = arith.constant 0 : index
      %c0_356 = arith.constant 0 : index
      %392 = vector.load %arg4[%c3_354, %c0_355, %c0_356] : memref<25x8x256xf32, #tpu.memory_space<vmem>>, vector<1x8x256xf32>
      %393 = vector.shape_cast %392 : vector<1x8x256xf32> to vector<8x256xf32>
      %394 = vector.broadcast %63 : f32 to vector<8x256xf32>
      %395 = arith.mulf %394, %393 : vector<8x256xf32>
      %396 = arith.addf %391, %395 : vector<8x256xf32>
      %c4_357 = arith.constant 4 : index
      %c0_358 = arith.constant 0 : index
      %c0_359 = arith.constant 0 : index
      %397 = vector.load %arg4[%c4_357, %c0_358, %c0_359] : memref<25x8x256xf32, #tpu.memory_space<vmem>>, vector<1x8x256xf32>
      %398 = vector.shape_cast %397 : vector<1x8x256xf32> to vector<8x256xf32>
      %399 = vector.broadcast %64 : f32 to vector<8x256xf32>
      %400 = arith.mulf %399, %398 : vector<8x256xf32>
      %401 = arith.addf %396, %400 : vector<8x256xf32>
      %c5_360 = arith.constant 5 : index
      %c0_361 = arith.constant 0 : index
      %c0_362 = arith.constant 0 : index
      %402 = vector.load %arg4[%c5_360, %c0_361, %c0_362] : memref<25x8x256xf32, #tpu.memory_space<vmem>>, vector<1x8x256xf32>
      %403 = vector.shape_cast %402 : vector<1x8x256xf32> to vector<8x256xf32>
      %404 = vector.broadcast %65 : f32 to vector<8x256xf32>
      %405 = arith.mulf %404, %403 : vector<8x256xf32>
      %406 = arith.addf %401, %405 : vector<8x256xf32>
      %c6_363 = arith.constant 6 : index
      %c0_364 = arith.constant 0 : index
      %c0_365 = arith.constant 0 : index
      %407 = vector.load %arg4[%c6_363, %c0_364, %c0_365] : memref<25x8x256xf32, #tpu.memory_space<vmem>>, vector<1x8x256xf32>
      %408 = vector.shape_cast %407 : vector<1x8x256xf32> to vector<8x256xf32>
      %409 = vector.broadcast %66 : f32 to vector<8x256xf32>
      %410 = arith.mulf %409, %408 : vector<8x256xf32>
      %411 = arith.addf %406, %410 : vector<8x256xf32>
      %c7_366 = arith.constant 7 : index
      %c0_367 = arith.constant 0 : index
      %c0_368 = arith.constant 0 : index
      %412 = vector.load %arg4[%c7_366, %c0_367, %c0_368] : memref<25x8x256xf32, #tpu.memory_space<vmem>>, vector<1x8x256xf32>
      %413 = vector.shape_cast %412 : vector<1x8x256xf32> to vector<8x256xf32>
      %414 = vector.broadcast %67 : f32 to vector<8x256xf32>
      %415 = arith.mulf %414, %413 : vector<8x256xf32>
      %416 = arith.addf %411, %415 : vector<8x256xf32>
      %c8_369 = arith.constant 8 : index
      %c0_370 = arith.constant 0 : index
      %c0_371 = arith.constant 0 : index
      %417 = vector.load %arg4[%c8_369, %c0_370, %c0_371] : memref<25x8x256xf32, #tpu.memory_space<vmem>>, vector<1x8x256xf32>
      %418 = vector.shape_cast %417 : vector<1x8x256xf32> to vector<8x256xf32>
      %419 = vector.broadcast %68 : f32 to vector<8x256xf32>
      %420 = arith.mulf %419, %418 : vector<8x256xf32>
      %421 = arith.addf %416, %420 : vector<8x256xf32>
      %c9_372 = arith.constant 9 : index
      %c0_373 = arith.constant 0 : index
      %c0_374 = arith.constant 0 : index
      %422 = vector.load %arg4[%c9_372, %c0_373, %c0_374] : memref<25x8x256xf32, #tpu.memory_space<vmem>>, vector<1x8x256xf32>
      %423 = vector.shape_cast %422 : vector<1x8x256xf32> to vector<8x256xf32>
      %424 = vector.broadcast %69 : f32 to vector<8x256xf32>
      %425 = arith.mulf %424, %423 : vector<8x256xf32>
      %426 = arith.addf %421, %425 : vector<8x256xf32>
      %c10_375 = arith.constant 10 : index
      %c0_376 = arith.constant 0 : index
      %c0_377 = arith.constant 0 : index
      %427 = vector.load %arg4[%c10_375, %c0_376, %c0_377] : memref<25x8x256xf32, #tpu.memory_space<vmem>>, vector<1x8x256xf32>
      %428 = vector.shape_cast %427 : vector<1x8x256xf32> to vector<8x256xf32>
      %429 = vector.broadcast %70 : f32 to vector<8x256xf32>
      %430 = arith.mulf %429, %428 : vector<8x256xf32>
      %431 = arith.addf %426, %430 : vector<8x256xf32>
      %c11_378 = arith.constant 11 : index
      %c0_379 = arith.constant 0 : index
      %c0_380 = arith.constant 0 : index
      %432 = vector.load %arg4[%c11_378, %c0_379, %c0_380] : memref<25x8x256xf32, #tpu.memory_space<vmem>>, vector<1x8x256xf32>
      %433 = vector.shape_cast %432 : vector<1x8x256xf32> to vector<8x256xf32>
      %434 = vector.broadcast %71 : f32 to vector<8x256xf32>
      %435 = arith.mulf %434, %433 : vector<8x256xf32>
      %436 = arith.addf %431, %435 : vector<8x256xf32>
      %c12_381 = arith.constant 12 : index
      %c0_382 = arith.constant 0 : index
      %c0_383 = arith.constant 0 : index
      %437 = vector.load %arg4[%c12_381, %c0_382, %c0_383] : memref<25x8x256xf32, #tpu.memory_space<vmem>>, vector<1x8x256xf32>
      %438 = vector.shape_cast %437 : vector<1x8x256xf32> to vector<8x256xf32>
      %439 = vector.broadcast %72 : f32 to vector<8x256xf32>
      %440 = arith.mulf %439, %438 : vector<8x256xf32>
      %441 = arith.addf %436, %440 : vector<8x256xf32>
      %c13_384 = arith.constant 13 : index
      %c0_385 = arith.constant 0 : index
      %c0_386 = arith.constant 0 : index
      %442 = vector.load %arg4[%c13_384, %c0_385, %c0_386] : memref<25x8x256xf32, #tpu.memory_space<vmem>>, vector<1x8x256xf32>
      %443 = vector.shape_cast %442 : vector<1x8x256xf32> to vector<8x256xf32>
      %444 = vector.broadcast %73 : f32 to vector<8x256xf32>
      %445 = arith.mulf %444, %443 : vector<8x256xf32>
      %446 = arith.addf %441, %445 : vector<8x256xf32>
      %c14_387 = arith.constant 14 : index
      %c0_388 = arith.constant 0 : index
      %c0_389 = arith.constant 0 : index
      %447 = vector.load %arg4[%c14_387, %c0_388, %c0_389] : memref<25x8x256xf32, #tpu.memory_space<vmem>>, vector<1x8x256xf32>
      %448 = vector.shape_cast %447 : vector<1x8x256xf32> to vector<8x256xf32>
      %449 = vector.broadcast %74 : f32 to vector<8x256xf32>
      %450 = arith.mulf %449, %448 : vector<8x256xf32>
      %451 = arith.addf %446, %450 : vector<8x256xf32>
      %c15_390 = arith.constant 15 : index
      %c0_391 = arith.constant 0 : index
      %c0_392 = arith.constant 0 : index
      %452 = vector.load %arg4[%c15_390, %c0_391, %c0_392] : memref<25x8x256xf32, #tpu.memory_space<vmem>>, vector<1x8x256xf32>
      %453 = vector.shape_cast %452 : vector<1x8x256xf32> to vector<8x256xf32>
      %454 = vector.broadcast %75 : f32 to vector<8x256xf32>
      %455 = arith.mulf %454, %453 : vector<8x256xf32>
      %456 = arith.addf %451, %455 : vector<8x256xf32>
      %c16_393 = arith.constant 16 : index
      %c0_394 = arith.constant 0 : index
      %c0_395 = arith.constant 0 : index
      %457 = vector.load %arg4[%c16_393, %c0_394, %c0_395] : memref<25x8x256xf32, #tpu.memory_space<vmem>>, vector<1x8x256xf32>
      %458 = vector.shape_cast %457 : vector<1x8x256xf32> to vector<8x256xf32>
      %459 = vector.broadcast %76 : f32 to vector<8x256xf32>
      %460 = arith.mulf %459, %458 : vector<8x256xf32>
      %461 = arith.addf %456, %460 : vector<8x256xf32>
      %c17_396 = arith.constant 17 : index
      %c0_397 = arith.constant 0 : index
      %c0_398 = arith.constant 0 : index
      %462 = vector.load %arg4[%c17_396, %c0_397, %c0_398] : memref<25x8x256xf32, #tpu.memory_space<vmem>>, vector<1x8x256xf32>
      %463 = vector.shape_cast %462 : vector<1x8x256xf32> to vector<8x256xf32>
      %464 = vector.broadcast %77 : f32 to vector<8x256xf32>
      %465 = arith.mulf %464, %463 : vector<8x256xf32>
      %466 = arith.addf %461, %465 : vector<8x256xf32>
      %c18_399 = arith.constant 18 : index
      %c0_400 = arith.constant 0 : index
      %c0_401 = arith.constant 0 : index
      %467 = vector.load %arg4[%c18_399, %c0_400, %c0_401] : memref<25x8x256xf32, #tpu.memory_space<vmem>>, vector<1x8x256xf32>
      %468 = vector.shape_cast %467 : vector<1x8x256xf32> to vector<8x256xf32>
      %469 = vector.broadcast %78 : f32 to vector<8x256xf32>
      %470 = arith.mulf %469, %468 : vector<8x256xf32>
      %471 = arith.addf %466, %470 : vector<8x256xf32>
      %c19_402 = arith.constant 19 : index
      %c0_403 = arith.constant 0 : index
      %c0_404 = arith.constant 0 : index
      %472 = vector.load %arg4[%c19_402, %c0_403, %c0_404] : memref<25x8x256xf32, #tpu.memory_space<vmem>>, vector<1x8x256xf32>
      %473 = vector.shape_cast %472 : vector<1x8x256xf32> to vector<8x256xf32>
      %474 = vector.broadcast %79 : f32 to vector<8x256xf32>
      %475 = arith.mulf %474, %473 : vector<8x256xf32>
      %476 = arith.addf %471, %475 : vector<8x256xf32>
      %c20_405 = arith.constant 20 : index
      %c0_406 = arith.constant 0 : index
      %c0_407 = arith.constant 0 : index
      %477 = vector.load %arg4[%c20_405, %c0_406, %c0_407] : memref<25x8x256xf32, #tpu.memory_space<vmem>>, vector<1x8x256xf32>
      %478 = vector.shape_cast %477 : vector<1x8x256xf32> to vector<8x256xf32>
      %479 = vector.broadcast %80 : f32 to vector<8x256xf32>
      %480 = arith.mulf %479, %478 : vector<8x256xf32>
      %481 = arith.addf %476, %480 : vector<8x256xf32>
      %c21_408 = arith.constant 21 : index
      %c0_409 = arith.constant 0 : index
      %c0_410 = arith.constant 0 : index
      %482 = vector.load %arg4[%c21_408, %c0_409, %c0_410] : memref<25x8x256xf32, #tpu.memory_space<vmem>>, vector<1x8x256xf32>
      %483 = vector.shape_cast %482 : vector<1x8x256xf32> to vector<8x256xf32>
      %484 = vector.broadcast %81 : f32 to vector<8x256xf32>
      %485 = arith.mulf %484, %483 : vector<8x256xf32>
      %486 = arith.addf %481, %485 : vector<8x256xf32>
      %c22_411 = arith.constant 22 : index
      %c0_412 = arith.constant 0 : index
      %c0_413 = arith.constant 0 : index
      %487 = vector.load %arg4[%c22_411, %c0_412, %c0_413] : memref<25x8x256xf32, #tpu.memory_space<vmem>>, vector<1x8x256xf32>
      %488 = vector.shape_cast %487 : vector<1x8x256xf32> to vector<8x256xf32>
      %489 = vector.broadcast %82 : f32 to vector<8x256xf32>
      %490 = arith.mulf %489, %488 : vector<8x256xf32>
      %491 = arith.addf %486, %490 : vector<8x256xf32>
      %c23_414 = arith.constant 23 : index
      %c0_415 = arith.constant 0 : index
      %c0_416 = arith.constant 0 : index
      %492 = vector.load %arg4[%c23_414, %c0_415, %c0_416] : memref<25x8x256xf32, #tpu.memory_space<vmem>>, vector<1x8x256xf32>
      %493 = vector.shape_cast %492 : vector<1x8x256xf32> to vector<8x256xf32>
      %494 = vector.broadcast %83 : f32 to vector<8x256xf32>
      %495 = arith.mulf %494, %493 : vector<8x256xf32>
      %496 = arith.addf %491, %495 : vector<8x256xf32>
      %c24_417 = arith.constant 24 : index
      %c0_418 = arith.constant 0 : index
      %c0_419 = arith.constant 0 : index
      %497 = vector.load %arg4[%c24_417, %c0_418, %c0_419] : memref<25x8x256xf32, #tpu.memory_space<vmem>>, vector<1x8x256xf32>
      %498 = vector.shape_cast %497 : vector<1x8x256xf32> to vector<8x256xf32>
      %499 = vector.broadcast %84 : f32 to vector<8x256xf32>
      %500 = arith.mulf %499, %498 : vector<8x256xf32>
      %501 = arith.addf %496, %500 : vector<8x256xf32>
      %502 = vector.broadcast %112 : f32 to vector<8x256xf32>
      %503 = arith.addf %501, %502 : vector<8x256xf32>
      %cst_420 = arith.constant 0.000000e+00 : f32
      %504 = vector.broadcast %cst_420 : f32 to vector<8x256xf32>
      %505 = arith.cmpf oge, %503, %504 : vector<8x256xf32>
      %cst_421 = arith.constant 0.00999999977 : f32
      %506 = vector.broadcast %cst_421 : f32 to vector<8x256xf32>
      %507 = arith.mulf %506, %503 : vector<8x256xf32>
      %508 = arith.select %505, %503, %507 : vector<8x256xi1>, vector<8x256xf32>
      %c0_422 = arith.constant 0 : index
      %c512 = arith.constant 512 : index
      %509 = vector.load %arg8[%c0_422, %c512] : memref<8x1024xf32, #tpu.memory_space<vmem>>, vector<8x256xf32>
      tpu.vector_store %arg8[%c0_422, %c512], %508 {strides = array<i32>} : memref<8x1024xf32, #tpu.memory_space<vmem>>, vector<8x256xf32>,
      %c0_423 = arith.constant 0 : index
      %c0_424 = arith.constant 0 : index
      %c0_425 = arith.constant 0 : index
      %510 = vector.load %arg4[%c0_423, %c0_424, %c0_425] : memref<25x8x256xf32, #tpu.memory_space<vmem>>, vector<1x8x256xf32>
      %511 = vector.shape_cast %510 : vector<1x8x256xf32> to vector<8x256xf32>
      %512 = vector.broadcast %85 : f32 to vector<8x256xf32>
      %513 = arith.mulf %512, %511 : vector<8x256xf32>
      %c1_426 = arith.constant 1 : index
      %c0_427 = arith.constant 0 : index
      %c0_428 = arith.constant 0 : index
      %514 = vector.load %arg4[%c1_426, %c0_427, %c0_428] : memref<25x8x256xf32, #tpu.memory_space<vmem>>, vector<1x8x256xf32>
      %515 = vector.shape_cast %514 : vector<1x8x256xf32> to vector<8x256xf32>
      %516 = vector.broadcast %86 : f32 to vector<8x256xf32>
      %517 = arith.mulf %516, %515 : vector<8x256xf32>
      %518 = arith.addf %513, %517 : vector<8x256xf32>
      %c2_429 = arith.constant 2 : index
      %c0_430 = arith.constant 0 : index
      %c0_431 = arith.constant 0 : index
      %519 = vector.load %arg4[%c2_429, %c0_430, %c0_431] : memref<25x8x256xf32, #tpu.memory_space<vmem>>, vector<1x8x256xf32>
      %520 = vector.shape_cast %519 : vector<1x8x256xf32> to vector<8x256xf32>
      %521 = vector.broadcast %87 : f32 to vector<8x256xf32>
      %522 = arith.mulf %521, %520 : vector<8x256xf32>
      %523 = arith.addf %518, %522 : vector<8x256xf32>
      %c3_432 = arith.constant 3 : index
      %c0_433 = arith.constant 0 : index
      %c0_434 = arith.constant 0 : index
      %524 = vector.load %arg4[%c3_432, %c0_433, %c0_434] : memref<25x8x256xf32, #tpu.memory_space<vmem>>, vector<1x8x256xf32>
      %525 = vector.shape_cast %524 : vector<1x8x256xf32> to vector<8x256xf32>
      %526 = vector.broadcast %88 : f32 to vector<8x256xf32>
      %527 = arith.mulf %526, %525 : vector<8x256xf32>
      %528 = arith.addf %523, %527 : vector<8x256xf32>
      %c4_435 = arith.constant 4 : index
      %c0_436 = arith.constant 0 : index
      %c0_437 = arith.constant 0 : index
      %529 = vector.load %arg4[%c4_435, %c0_436, %c0_437] : memref<25x8x256xf32, #tpu.memory_space<vmem>>, vector<1x8x256xf32>
      %530 = vector.shape_cast %529 : vector<1x8x256xf32> to vector<8x256xf32>
      %531 = vector.broadcast %89 : f32 to vector<8x256xf32>
      %532 = arith.mulf %531, %530 : vector<8x256xf32>
      %533 = arith.addf %528, %532 : vector<8x256xf32>
      %c5_438 = arith.constant 5 : index
      %c0_439 = arith.constant 0 : index
      %c0_440 = arith.constant 0 : index
      %534 = vector.load %arg4[%c5_438, %c0_439, %c0_440] : memref<25x8x256xf32, #tpu.memory_space<vmem>>, vector<1x8x256xf32>
      %535 = vector.shape_cast %534 : vector<1x8x256xf32> to vector<8x256xf32>
      %536 = vector.broadcast %90 : f32 to vector<8x256xf32>
      %537 = arith.mulf %536, %535 : vector<8x256xf32>
      %538 = arith.addf %533, %537 : vector<8x256xf32>
      %c6_441 = arith.constant 6 : index
      %c0_442 = arith.constant 0 : index
      %c0_443 = arith.constant 0 : index
      %539 = vector.load %arg4[%c6_441, %c0_442, %c0_443] : memref<25x8x256xf32, #tpu.memory_space<vmem>>, vector<1x8x256xf32>
      %540 = vector.shape_cast %539 : vector<1x8x256xf32> to vector<8x256xf32>
      %541 = vector.broadcast %91 : f32 to vector<8x256xf32>
      %542 = arith.mulf %541, %540 : vector<8x256xf32>
      %543 = arith.addf %538, %542 : vector<8x256xf32>
      %c7_444 = arith.constant 7 : index
      %c0_445 = arith.constant 0 : index
      %c0_446 = arith.constant 0 : index
      %544 = vector.load %arg4[%c7_444, %c0_445, %c0_446] : memref<25x8x256xf32, #tpu.memory_space<vmem>>, vector<1x8x256xf32>
      %545 = vector.shape_cast %544 : vector<1x8x256xf32> to vector<8x256xf32>
      %546 = vector.broadcast %92 : f32 to vector<8x256xf32>
      %547 = arith.mulf %546, %545 : vector<8x256xf32>
      %548 = arith.addf %543, %547 : vector<8x256xf32>
      %c8_447 = arith.constant 8 : index
      %c0_448 = arith.constant 0 : index
      %c0_449 = arith.constant 0 : index
      %549 = vector.load %arg4[%c8_447, %c0_448, %c0_449] : memref<25x8x256xf32, #tpu.memory_space<vmem>>, vector<1x8x256xf32>
      %550 = vector.shape_cast %549 : vector<1x8x256xf32> to vector<8x256xf32>
      %551 = vector.broadcast %93 : f32 to vector<8x256xf32>
      %552 = arith.mulf %551, %550 : vector<8x256xf32>
      %553 = arith.addf %548, %552 : vector<8x256xf32>
      %c9_450 = arith.constant 9 : index
      %c0_451 = arith.constant 0 : index
      %c0_452 = arith.constant 0 : index
      %554 = vector.load %arg4[%c9_450, %c0_451, %c0_452] : memref<25x8x256xf32, #tpu.memory_space<vmem>>, vector<1x8x256xf32>
      %555 = vector.shape_cast %554 : vector<1x8x256xf32> to vector<8x256xf32>
      %556 = vector.broadcast %94 : f32 to vector<8x256xf32>
      %557 = arith.mulf %556, %555 : vector<8x256xf32>
      %558 = arith.addf %553, %557 : vector<8x256xf32>
      %c10_453 = arith.constant 10 : index
      %c0_454 = arith.constant 0 : index
      %c0_455 = arith.constant 0 : index
      %559 = vector.load %arg4[%c10_453, %c0_454, %c0_455] : memref<25x8x256xf32, #tpu.memory_space<vmem>>, vector<1x8x256xf32>
      %560 = vector.shape_cast %559 : vector<1x8x256xf32> to vector<8x256xf32>
      %561 = vector.broadcast %95 : f32 to vector<8x256xf32>
      %562 = arith.mulf %561, %560 : vector<8x256xf32>
      %563 = arith.addf %558, %562 : vector<8x256xf32>
      %c11_456 = arith.constant 11 : index
      %c0_457 = arith.constant 0 : index
      %c0_458 = arith.constant 0 : index
      %564 = vector.load %arg4[%c11_456, %c0_457, %c0_458] : memref<25x8x256xf32, #tpu.memory_space<vmem>>, vector<1x8x256xf32>
      %565 = vector.shape_cast %564 : vector<1x8x256xf32> to vector<8x256xf32>
      %566 = vector.broadcast %96 : f32 to vector<8x256xf32>
      %567 = arith.mulf %566, %565 : vector<8x256xf32>
      %568 = arith.addf %563, %567 : vector<8x256xf32>
      %c12_459 = arith.constant 12 : index
      %c0_460 = arith.constant 0 : index
      %c0_461 = arith.constant 0 : index
      %569 = vector.load %arg4[%c12_459, %c0_460, %c0_461] : memref<25x8x256xf32, #tpu.memory_space<vmem>>, vector<1x8x256xf32>
      %570 = vector.shape_cast %569 : vector<1x8x256xf32> to vector<8x256xf32>
      %571 = vector.broadcast %97 : f32 to vector<8x256xf32>
      %572 = arith.mulf %571, %570 : vector<8x256xf32>
      %573 = arith.addf %568, %572 : vector<8x256xf32>
      %c13_462 = arith.constant 13 : index
      %c0_463 = arith.constant 0 : index
      %c0_464 = arith.constant 0 : index
      %574 = vector.load %arg4[%c13_462, %c0_463, %c0_464] : memref<25x8x256xf32, #tpu.memory_space<vmem>>, vector<1x8x256xf32>
      %575 = vector.shape_cast %574 : vector<1x8x256xf32> to vector<8x256xf32>
      %576 = vector.broadcast %98 : f32 to vector<8x256xf32>
      %577 = arith.mulf %576, %575 : vector<8x256xf32>
      %578 = arith.addf %573, %577 : vector<8x256xf32>
      %c14_465 = arith.constant 14 : index
      %c0_466 = arith.constant 0 : index
      %c0_467 = arith.constant 0 : index
      %579 = vector.load %arg4[%c14_465, %c0_466, %c0_467] : memref<25x8x256xf32, #tpu.memory_space<vmem>>, vector<1x8x256xf32>
      %580 = vector.shape_cast %579 : vector<1x8x256xf32> to vector<8x256xf32>
      %581 = vector.broadcast %99 : f32 to vector<8x256xf32>
      %582 = arith.mulf %581, %580 : vector<8x256xf32>
      %583 = arith.addf %578, %582 : vector<8x256xf32>
      %c15_468 = arith.constant 15 : index
      %c0_469 = arith.constant 0 : index
      %c0_470 = arith.constant 0 : index
      %584 = vector.load %arg4[%c15_468, %c0_469, %c0_470] : memref<25x8x256xf32, #tpu.memory_space<vmem>>, vector<1x8x256xf32>
      %585 = vector.shape_cast %584 : vector<1x8x256xf32> to vector<8x256xf32>
      %586 = vector.broadcast %100 : f32 to vector<8x256xf32>
      %587 = arith.mulf %586, %585 : vector<8x256xf32>
      %588 = arith.addf %583, %587 : vector<8x256xf32>
      %c16_471 = arith.constant 16 : index
      %c0_472 = arith.constant 0 : index
      %c0_473 = arith.constant 0 : index
      %589 = vector.load %arg4[%c16_471, %c0_472, %c0_473] : memref<25x8x256xf32, #tpu.memory_space<vmem>>, vector<1x8x256xf32>
      %590 = vector.shape_cast %589 : vector<1x8x256xf32> to vector<8x256xf32>
      %591 = vector.broadcast %101 : f32 to vector<8x256xf32>
      %592 = arith.mulf %591, %590 : vector<8x256xf32>
      %593 = arith.addf %588, %592 : vector<8x256xf32>
      %c17_474 = arith.constant 17 : index
      %c0_475 = arith.constant 0 : index
      %c0_476 = arith.constant 0 : index
      %594 = vector.load %arg4[%c17_474, %c0_475, %c0_476] : memref<25x8x256xf32, #tpu.memory_space<vmem>>, vector<1x8x256xf32>
      %595 = vector.shape_cast %594 : vector<1x8x256xf32> to vector<8x256xf32>
      %596 = vector.broadcast %102 : f32 to vector<8x256xf32>
      %597 = arith.mulf %596, %595 : vector<8x256xf32>
      %598 = arith.addf %593, %597 : vector<8x256xf32>
      %c18_477 = arith.constant 18 : index
      %c0_478 = arith.constant 0 : index
      %c0_479 = arith.constant 0 : index
      %599 = vector.load %arg4[%c18_477, %c0_478, %c0_479] : memref<25x8x256xf32, #tpu.memory_space<vmem>>, vector<1x8x256xf32>
      %600 = vector.shape_cast %599 : vector<1x8x256xf32> to vector<8x256xf32>
      %601 = vector.broadcast %103 : f32 to vector<8x256xf32>
      %602 = arith.mulf %601, %600 : vector<8x256xf32>
      %603 = arith.addf %598, %602 : vector<8x256xf32>
      %c19_480 = arith.constant 19 : index
      %c0_481 = arith.constant 0 : index
      %c0_482 = arith.constant 0 : index
      %604 = vector.load %arg4[%c19_480, %c0_481, %c0_482] : memref<25x8x256xf32, #tpu.memory_space<vmem>>, vector<1x8x256xf32>
      %605 = vector.shape_cast %604 : vector<1x8x256xf32> to vector<8x256xf32>
      %606 = vector.broadcast %104 : f32 to vector<8x256xf32>
      %607 = arith.mulf %606, %605 : vector<8x256xf32>
      %608 = arith.addf %603, %607 : vector<8x256xf32>
      %c20_483 = arith.constant 20 : index
      %c0_484 = arith.constant 0 : index
      %c0_485 = arith.constant 0 : index
      %609 = vector.load %arg4[%c20_483, %c0_484, %c0_485] : memref<25x8x256xf32, #tpu.memory_space<vmem>>, vector<1x8x256xf32>
      %610 = vector.shape_cast %609 : vector<1x8x256xf32> to vector<8x256xf32>
      %611 = vector.broadcast %105 : f32 to vector<8x256xf32>
      %612 = arith.mulf %611, %610 : vector<8x256xf32>
      %613 = arith.addf %608, %612 : vector<8x256xf32>
      %c21_486 = arith.constant 21 : index
      %c0_487 = arith.constant 0 : index
      %c0_488 = arith.constant 0 : index
      %614 = vector.load %arg4[%c21_486, %c0_487, %c0_488] : memref<25x8x256xf32, #tpu.memory_space<vmem>>, vector<1x8x256xf32>
      %615 = vector.shape_cast %614 : vector<1x8x256xf32> to vector<8x256xf32>
      %616 = vector.broadcast %106 : f32 to vector<8x256xf32>
      %617 = arith.mulf %616, %615 : vector<8x256xf32>
      %618 = arith.addf %613, %617 : vector<8x256xf32>
      %c22_489 = arith.constant 22 : index
      %c0_490 = arith.constant 0 : index
      %c0_491 = arith.constant 0 : index
      %619 = vector.load %arg4[%c22_489, %c0_490, %c0_491] : memref<25x8x256xf32, #tpu.memory_space<vmem>>, vector<1x8x256xf32>
      %620 = vector.shape_cast %619 : vector<1x8x256xf32> to vector<8x256xf32>
      %621 = vector.broadcast %107 : f32 to vector<8x256xf32>
      %622 = arith.mulf %621, %620 : vector<8x256xf32>
      %623 = arith.addf %618, %622 : vector<8x256xf32>
      %c23_492 = arith.constant 23 : index
      %c0_493 = arith.constant 0 : index
      %c0_494 = arith.constant 0 : index
      %624 = vector.load %arg4[%c23_492, %c0_493, %c0_494] : memref<25x8x256xf32, #tpu.memory_space<vmem>>, vector<1x8x256xf32>
      %625 = vector.shape_cast %624 : vector<1x8x256xf32> to vector<8x256xf32>
      %626 = vector.broadcast %108 : f32 to vector<8x256xf32>
      %627 = arith.mulf %626, %625 : vector<8x256xf32>
      %628 = arith.addf %623, %627 : vector<8x256xf32>
      %c24_495 = arith.constant 24 : index
      %c0_496 = arith.constant 0 : index
      %c0_497 = arith.constant 0 : index
      %629 = vector.load %arg4[%c24_495, %c0_496, %c0_497] : memref<25x8x256xf32, #tpu.memory_space<vmem>>, vector<1x8x256xf32>
      %630 = vector.shape_cast %629 : vector<1x8x256xf32> to vector<8x256xf32>
      %631 = vector.broadcast %109 : f32 to vector<8x256xf32>
      %632 = arith.mulf %631, %630 : vector<8x256xf32>
      %633 = arith.addf %628, %632 : vector<8x256xf32>
      %634 = vector.broadcast %113 : f32 to vector<8x256xf32>
      %635 = arith.addf %633, %634 : vector<8x256xf32>
      %cst_498 = arith.constant 0.000000e+00 : f32
      %636 = vector.broadcast %cst_498 : f32 to vector<8x256xf32>
      %637 = arith.cmpf oge, %635, %636 : vector<8x256xf32>
      %cst_499 = arith.constant 0.00999999977 : f32
      %638 = vector.broadcast %cst_499 : f32 to vector<8x256xf32>
      %639 = arith.mulf %638, %635 : vector<8x256xf32>
      %640 = arith.select %637, %635, %639 : vector<8x256xi1>, vector<8x256xf32>
      %c0_500 = arith.constant 0 : index
      %c768 = arith.constant 768 : index
      %641 = vector.load %arg8[%c0_500, %c768] : memref<8x1024xf32, #tpu.memory_space<vmem>>, vector<8x256xf32>
      tpu.vector_store %arg8[%c0_500, %c768], %640 {strides = array<i32>} : memref<8x1024xf32, #tpu.memory_space<vmem>>, vector<8x256xf32>,
    } else {
    }
    %c0 = arith.constant 0 : index
    %c0_1 = arith.constant 0 : index
    %3 = vector.load %arg8[%c0, %c0_1] : memref<8x1024xf32, #tpu.memory_space<vmem>>, vector<8x1024xf32>
    %c0_2 = arith.constant 0 : index
    %c0_3 = arith.constant 0 : index
    %4 = vector.load %arg5[%c0_2, %c0_3] : memref<1024x128xf32, #tpu.memory_space<vmem>>, vector<1024x128xf32>
    %cst = arith.constant dense<0.000000e+00> : vector<8x128xf32>
    %5 = tpu.matmul %3, %4, %cst {dimension_numbers = #tpu.dot_dimension_numbers<[1], [0], [0], [1], [0, 0, 1, 1], [], []>} : vector<8x1024xf32>, vector<1024x128xf32>, vector<8x128xf32> -> vector<8x128xf32>
    %c0_4 = arith.constant 0 : index
    %c0_5 = arith.constant 0 : index
    %6 = vector.load %arg6[%c0_4, %c0_5] : memref<1x128xf32, #tpu.memory_space<vmem>>, vector<1x128xf32>
    %7 = vector.broadcast %6 : vector<1x128xf32> to vector<8x128xf32>
    %8 = arith.addf %5, %7 : vector<8x128xf32>
    %c0_6 = arith.constant 0 : index
    %c0_7 = arith.constant 0 : index
    %9 = vector.load %arg7[%c0_6, %c0_7] : memref<8x128xf32, #tpu.memory_space<vmem>>, vector<8x128xf32>
    tpu.vector_store %arg7[%c0_6, %c0_7], %8 {strides = array<i32>} : memref<8x128xf32, #tpu.memory_space<vmem>>, vector<8x128xf32>,
    return
  }
  func.func @transform_0(%arg0: i32, %arg1: i32) -> (i32, i32) {
    %c0_i32 = arith.constant 0 : i32
    %c0_i32_0 = arith.constant 0 : i32
    %c0_i32_1 = arith.constant 0 : i32
    return %c0_i32, %c0_i32_0 : i32, i32
  }
  func.func @transform_1(%arg0: i32, %arg1: i32) -> i32 {
    %c0_i32 = arith.constant 0 : i32
    %c0_i32_0 = arith.constant 0 : i32
    return %c0_i32 : i32
  }
  func.func @transform_2(%arg0: i32, %arg1: i32) -> (i32, i32, i32) {
    %c0_i32 = arith.constant 0 : i32
    %c0_i32_0 = arith.constant 0 : i32
    %c0_i32_1 = arith.constant 0 : i32
    return %c0_i32, %arg0, %c0_i32_0 : i32, i32, i32
  }
  func.func @transform_3(%arg0: i32, %arg1: i32) -> (i32, i32) {
    %c0_i32 = arith.constant 0 : i32
    %c0_i32_0 = arith.constant 0 : i32
    return %c0_i32, %arg1 : i32, i32
  }
  func.func @transform_4(%arg0: i32, %arg1: i32) -> (i32, i32) {
    %c0_i32 = arith.constant 0 : i32
    %c0_i32_0 = arith.constant 0 : i32
    return %c0_i32, %arg1 : i32, i32
  }
  func.func @transform_5(%arg0: i32, %arg1: i32) -> (i32, i32) {
    %c0_i32 = arith.constant 0 : i32
    return %arg0, %arg1 : i32, i32
  }
}

</mosaic_0001>

<llo_original>
// kernel: tpu_custom_call.1
$region0: #{tpu_custom_call.1}
  #allocation0 [shape = 'u32[]', space=smem, size = 0x4, offset = 0x4, fixed_abs, tag = 'smem constant byte address 0x4 - core index']
  #allocation1 [shape = 'u32[144,128]{1,0:T(1,128)}', space=vmem, size = 0x12000, scoped, tag = 'internal scratch']
  #allocation2 [shape = 'f32[8,1024]{1,0:T(8,128)}', space=vmem, size = 0x8000, scoped, tag = 'scratch operand']
  %s0 = inlined_call_operand.hbm [shape: f32[4,25], index: 0, kind: input, shape index: {}]
  %s1 = inlined_call_operand.vmem [shape: f32[4], index: 1, kind: input, shape index: {}]
  %s2 = inlined_call_operand.hbm [shape: f32[25,8,256], index: 2, kind: input, shape index: {}]
  %s3 = inlined_call_operand.hbm [shape: f32[1024,128], index: 3, kind: input, shape index: {}]
  %s4 = inlined_call_operand.vmem [shape: f32[1,128], index: 4, kind: input, shape index: {}]
  %s5 = inlined_call_operand.hbm [shape: f32[8,128], index: 5, kind: output, shape index: {}]
  %s6 = sld [smem:[#allocation0]]
  $region50: #{tpu_custom_call.1} parent=0
    _
  %s8 = ssub.s32 1, %s6
  %s9 = scalar_select 0, %s8, %s6
  $region1: #{tpu_custom_call.1} parent=0
    #allocation3 [shape = 'u8[2048]{0}', space=smem, size = 0x800, scoped, tag = 'input window, operand 0, single buffered']
    #allocation4 [shape = 's32[1]{0}', space=sflag, size = 0x4, scoped, tag = 'scoped memory for tpu_custom_call.1']
    #allocation5 [shape = 's32[1]{0}', space=sflag, size = 0x4, scoped, tag = 'scoped memory for tpu_custom_call.1']
    #allocation6 [shape = 's32[1]{0}', space=sflag, size = 0x4, scoped, tag = 'scoped memory for tpu_custom_call.1']
    #allocation7 [shape = 's32[1]{0}', space=sflag, size = 0x4, scoped, tag = 'scoped memory for tpu_custom_call.1']
    #allocation8 [shape = 'u8[512]{0}', space=smem, size = 0x200, scoped, tag = 'input window, operand 1, single buffered']
    #allocation9 [shape = 'u8[204800]{0}', space=vmem, size = 0x32000, scoped, tag = 'input window, operand 2, single buffered']
    #allocation10 [shape = 'u8[524288]{0}', space=vmem, size = 0x80000, scoped, tag = 'input window, operand 3, single buffered']
    #allocation11 [shape = 's32[1]{0}', space=sflag, size = 0x4, scoped, tag = 'scoped memory for tpu_custom_call.1']
    #allocation12 [shape = 'u8[4096]{0}', space=vmem, size = 0x1000, scoped, tag = 'output window, operand 0, single buffered']
    %10 = vsyncpa [#allocation6], 0
    %11 = vsyncpa [#allocation7], 0
    %12 = vsyncpa [#allocation4], 0
    %13 = vsyncpa [#allocation11], 0
    %14 = vsyncpa [#allocation5], 0
    // Predicated region
    $region2: #{tpu_custom_call.1} parent=1 // pred_check
      _
    $region3: #{tpu_custom_call.1} parent=1 // pred_check_branch
      %16 = sbr.rel (0) target = $region5
    $region4: #{tpu_custom_call.1} parent=1 // pred_region
      %s18 = ssub.s32 64, 64
      %19 = vsyncadd [#allocation6], %s18
      %22 = dma.hbm_to_smem %s0, 64, [#allocation3], [#allocation6]
    $region5: #{tpu_custom_call.1} parent=1 // pred_fallthru
      _
    // Predicated region
    $region6: #{tpu_custom_call.1} parent=1 // pred_check
      _
    $region7: #{tpu_custom_call.1} parent=1 // pred_check_branch
      %24 = sbr.rel (0) target = $region9
    $region8: #{tpu_custom_call.1} parent=1 // pred_region
      %s26 = ssub.s32 16, 16
      %27 = vsyncadd [#allocation7], %s26
      %s29 = sshll.u32 %s1, 4
      %s30 = int_to_ptr.vmem [resolvable:$true] %s29
      %32 = dma.vmem_to_smem %s30, 16, [#allocation8], [#allocation7]
    $region9: #{tpu_custom_call.1} parent=1 // pred_fallthru
      _
    // Predicated region
    $region10: #{tpu_custom_call.1} parent=1 // pred_check
      _
    $region11: #{tpu_custom_call.1} parent=1 // pred_check_branch
      %34 = sbr.rel (0) target = $region13
    $region12: #{tpu_custom_call.1} parent=1 // pred_region
      %s36 = ssub.s32 6400, 6400
      %37 = vsyncadd [#allocation4], %s36
      %s38 = sshll.u32 [#allocation9], 4
      %s39 = int_to_ptr.vmem [resolvable:$true] %s38
      %44 = dma.hbm_to_vmem [thread:$0]  %s2, 6400, %s39, [#allocation4], 256, 256, 16
    $region13: #{tpu_custom_call.1} parent=1 // pred_fallthru
      _
    // Predicated region
    $region14: #{tpu_custom_call.1} parent=1 // pred_check
      _
    $region15: #{tpu_custom_call.1} parent=1 // pred_check_branch
      %46 = sbr.rel (0) target = $region17
    $region16: #{tpu_custom_call.1} parent=1 // pred_region
      %s48 = ssub.s32 16384, 16384
      %49 = vsyncadd [#allocation11], %s48
      %s50 = sshll.u32 [#allocation10], 4
      %s51 = int_to_ptr.vmem [resolvable:$true] %s50
      %56 = dma.hbm_to_vmem [thread:$0]  %s3, 16384, %s51, [#allocation11], 128, 128, 8
    $region17: #{tpu_custom_call.1} parent=1 // pred_fallthru
      _
    // Predicated region
    $region18: #{tpu_custom_call.1} parent=1 // pred_check
      _
    $region19: #{tpu_custom_call.1} parent=1 // pred_check_branch
      %58 = sbr.rel (0) target = $region21
    $region20: #{tpu_custom_call.1} parent=1 // pred_region
      _
    $region21: #{tpu_custom_call.1} parent=1 // pred_fallthru
      _
    // Predicated region
    $region22: #{tpu_custom_call.1} parent=1 // pred_check
      _
    $region23: #{tpu_custom_call.1} parent=1 // pred_check_branch
      %60 = sbr.rel (0) target = $region25
    $region24: #{tpu_custom_call.1} parent=1 // pred_region
      %61 = dma.done [#allocation6], 64
    $region25: #{tpu_custom_call.1} parent=1 // pred_fallthru
      _
    // Predicated region
    $region26: #{tpu_custom_call.1} parent=1 // pred_check
      _
    $region27: #{tpu_custom_call.1} parent=1 // pred_check_branch
      %63 = sbr.rel (0) target = $region29
    $region28: #{tpu_custom_call.1} parent=1 // pred_region
      %64 = dma.done [#allocation7], 16
    $region29: #{tpu_custom_call.1} parent=1 // pred_fallthru
      _
    // Predicated region
    $region30: #{tpu_custom_call.1} parent=1 // pred_check
      _
    $region31: #{tpu_custom_call.1} parent=1 // pred_check_branch
      %66 = sbr.rel (0) target = $region33
    $region32: #{tpu_custom_call.1} parent=1 // pred_region
      %67 = dma.done [#allocation4], 6400
    $region33: #{tpu_custom_call.1} parent=1 // pred_fallthru
      _
    // Predicated region
    $region34: #{tpu_custom_call.1} parent=1 // pred_check
      _
    $region35: #{tpu_custom_call.1} parent=1 // pred_check_branch
      %69 = sbr.rel (0) target = $region37
    $region36: #{tpu_custom_call.1} parent=1 // pred_region
      %70 = dma.done [#allocation11], 16384
    $region37: #{tpu_custom_call.1} parent=1 // pred_fallthru
      _
    %71 = sfence
    %p72 = scmp.eq.s32.totalorder 0, 0
    // Predicated region
    $region38: #{tpu_custom_call.1} parent=1 // pred_check
      %p73 = pneg %p72
    $region39: #{tpu_custom_call.1} parent=1 // pred_check_branch
      %75 = sbr.rel (%p73) target = $region41
    $region40: #{tpu_custom_call.1} parent=1 // pred_region
      %s76 = sld [smem:[#allocation3]]
      %s77 = sld [smem:[#allocation3 + $0x1]]
      %s78 = sld [smem:[#allocation3 + $0x2]]
      %s79 = sld [smem:[#allocation3 + $0x3]]
      %s80 = sld [smem:[#allocation3 + $0x4]]
      %s81 = sld [smem:[#allocation3 + $0x5]]
      %s82 = sld [smem:[#allocation3 + $0x6]]
      %s83 = sld [smem:[#allocation3 + $0x7]]
      %s84 = sld [smem:[#allocation3 + $0x8]]
      %s85 = sld [smem:[#allocation3 + $0x9]]
      %s86 = sld [smem:[#allocation3 + $0xa]]
      %s87 = sld [smem:[#allocation3 + $0xb]]
      %s88 = sld [smem:[#allocation3 + $0xc]]
      %s89 = sld [smem:[#allocation3 + $0xd]]
      %s90 = sld [smem:[#allocation3 + $0xe]]
      %s91 = sld [smem:[#allocation3 + $0xf]]
      %s92 = sld [smem:[#allocation3 + $0x10]]
      %s93 = sld [smem:[#allocation3 + $0x11]]
      %s94 = sld [smem:[#allocation3 + $0x12]]
      %s95 = sld [smem:[#allocation3 + $0x13]]
      %s96 = sld [smem:[#allocation3 + $0x14]]
      %s97 = sld [smem:[#allocation3 + $0x15]]
      %s98 = sld [smem:[#allocation3 + $0x16]]
      %s99 = sld [smem:[#allocation3 + $0x17]]
      %s100 = sld [smem:[#allocation3 + $0x18]]
      %s101 = sld [smem:[#allocation3 + $0x80]]
      %s102 = sld [smem:[#allocation3 + $0x81]]
      %s103 = sld [smem:[#allocation3 + $0x82]]
      %s104 = sld [smem:[#allocation3 + $0x83]]
      %s105 = sld [smem:[#allocation3 + $0x84]]
      %s106 = sld [smem:[#allocation3 + $0x85]]
      %s107 = sld [smem:[#allocation3 + $0x86]]
      %s108 = sld [smem:[#allocation3 + $0x87]]
      %s109 = sld [smem:[#allocation3 + $0x88]]
      %s110 = sld [smem:[#allocation3 + $0x89]]
      %s111 = sld [smem:[#allocation3 + $0x8a]]
      %s112 = sld [smem:[#allocation3 + $0x8b]]
      %s113 = sld [smem:[#allocation3 + $0x8c]]
      %s114 = sld [smem:[#allocation3 + $0x8d]]
      %s115 = sld [smem:[#allocation3 + $0x8e]]
      %s116 = sld [smem:[#allocation3 + $0x8f]]
      %s117 = sld [smem:[#allocation3 + $0x90]]
      %s118 = sld [smem:[#allocation3 + $0x91]]
      %s119 = sld [smem:[#allocation3 + $0x92]]
      %s120 = sld [smem:[#allocation3 + $0x93]]
      %s121 = sld [smem:[#allocation3 + $0x94]]
      %s122 = sld [smem:[#allocation3 + $0x95]]
      %s123 = sld [smem:[#allocation3 + $0x96]]
      %s124 = sld [smem:[#allocation3 + $0x97]]
      %s125 = sld [smem:[#allocation3 + $0x98]]
      %s126 = sld [smem:[#allocation3 + $0x100]]
      %s127 = sld [smem:[#allocation3 + $0x101]]
      %s128 = sld [smem:[#allocation3 + $0x102]]
      %s129 = sld [smem:[#allocation3 + $0x103]]
      %s130 = sld [smem:[#allocation3 + $0x104]]
      %s131 = sld [smem:[#allocation3 + $0x105]]
      %s132 = sld [smem:[#allocation3 + $0x106]]
      %s133 = sld [smem:[#allocation3 + $0x107]]
      %s134 = sld [smem:[#allocation3 + $0x108]]
      %s135 = sld [smem:[#allocation3 + $0x109]]
      %s136 = sld [smem:[#allocation3 + $0x10a]]
      %s137 = sld [smem:[#allocation3 + $0x10b]]
      %s138 = sld [smem:[#allocation3 + $0x10c]]
      %s139 = sld [smem:[#allocation3 + $0x10d]]
      %s140 = sld [smem:[#allocation3 + $0x10e]]
      %s141 = sld [smem:[#allocation3 + $0x10f]]
      %s142 = sld [smem:[#allocation3 + $0x110]]
      %s143 = sld [smem:[#allocation3 + $0x111]]
      %s144 = sld [smem:[#allocation3 + $0x112]]
      %s145 = sld [smem:[#allocation3 + $0x113]]
      %s146 = sld [smem:[#allocation3 + $0x114]]
      %s147 = sld [smem:[#allocation3 + $0x115]]
      %s148 = sld [smem:[#allocation3 + $0x116]]
      %s149 = sld [smem:[#allocation3 + $0x117]]
      %s150 = sld [smem:[#allocation3 + $0x118]]
      %s151 = sld [smem:[#allocation3 + $0x180]]
      %s152 = sld [smem:[#allocation3 + $0x181]]
      %s153 = sld [smem:[#allocation3 + $0x182]]
      %s154 = sld [smem:[#allocation3 + $0x183]]
      %s155 = sld [smem:[#allocation3 + $0x184]]
      %s156 = sld [smem:[#allocation3 + $0x185]]
      %s157 = sld [smem:[#allocation3 + $0x186]]
      %s158 = sld [smem:[#allocation3 + $0x187]]
      %s159 = sld [smem:[#allocation3 + $0x188]]
      %s160 = sld [smem:[#allocation3 + $0x189]]
      %s161 = sld [smem:[#allocation3 + $0x18a]]
      %s162 = sld [smem:[#allocation3 + $0x18b]]
      %s163 = sld [smem:[#allocation3 + $0x18c]]
      %s164 = sld [smem:[#allocation3 + $0x18d]]
      %s165 = sld [smem:[#allocation3 + $0x18e]]
      %s166 = sld [smem:[#allocation3 + $0x18f]]
      %s167 = sld [smem:[#allocation3 + $0x190]]
      %s168 = sld [smem:[#allocation3 + $0x191]]
      %s169 = sld [smem:[#allocation3 + $0x192]]
      %s170 = sld [smem:[#allocation3 + $0x193]]
      %s171 = sld [smem:[#allocation3 + $0x194]]
      %s172 = sld [smem:[#allocation3 + $0x195]]
      %s173 = sld [smem:[#allocation3 + $0x196]]
      %s174 = sld [smem:[#allocation3 + $0x197]]
      %s175 = sld [smem:[#allocation3 + $0x198]]
      %s176 = sld [smem:[#allocation8]]
      %s177 = sld [smem:[#allocation8 + $0x1]]
      %s178 = sld [smem:[#allocation8 + $0x2]]
      %s179 = sld [smem:[#allocation8 + $0x3]]
      %v180 = vld [vmem:[#allocation9] sm:$0xff]
      %v181 = vld [vmem:[#allocation9 + $0x8] sm:$0xff]
      %v182 = vstv %s76
      %v183 = vmul.f32 %v182, %v180
      %v184 = vmul.f32 %v182, %v181
      %s185 = scalar_lea.vmem [#allocation9], 16
      %v186 = vld [vmem:[%s185] sm:$0xff]
      %v187 = vld [vmem:[%s185 + $0x8] sm:$0xff]
      %v188 = vstv %s77
      %v189 = vmul.f32 %v188, %v186
      %v190 = vmul.f32 %v188, %v187
      %v191 = vadd.f32 %v183, %v189
      %v192 = vadd.f32 %v184, %v190
      %s193 = scalar_lea.vmem [#allocation9], 32
      %v194 = vld [vmem:[%s193] sm:$0xff]
      %v195 = vld [vmem:[%s193 + $0x8] sm:$0xff]
      %v196 = vstv %s78
      %v197 = vmul.f32 %v196, %v194
      %v198 = vmul.f32 %v196, %v195
      %v199 = vadd.f32 %v191, %v197
      %v200 = vadd.f32 %v192, %v198
      %s201 = scalar_lea.vmem [#allocation9], 48
      %v202 = vld [vmem:[%s201] sm:$0xff]
      %v203 = vld [vmem:[%s201 + $0x8] sm:$0xff]
      %v204 = vstv %s79
      %v205 = vmul.f32 %v204, %v202
      %v206 = vmul.f32 %v204, %v203
      %v207 = vadd.f32 %v199, %v205
      %v208 = vadd.f32 %v200, %v206
      %s209 = scalar_lea.vmem [#allocation9], 64
      %v210 = vld [vmem:[%s209] sm:$0xff]
      %v211 = vld [vmem:[%s209 + $0x8] sm:$0xff]
      %v212 = vstv %s80
      %v213 = vmul.f32 %v212, %v210
      %v214 = vmul.f32 %v212, %v211
      %v215 = vadd.f32 %v207, %v213
      %v216 = vadd.f32 %v208, %v214
      %s217 = scalar_lea.vmem [#allocation9], 80
      %v218 = vld [vmem:[%s217] sm:$0xff]
      %v219 = vld [vmem:[%s217 + $0x8] sm:$0xff]
      %v220 = vstv %s81
      %v221 = vmul.f32 %v220, %v218
      %v222 = vmul.f32 %v220, %v219
      %v223 = vadd.f32 %v215, %v221
      %v224 = vadd.f32 %v216, %v222
      %s225 = scalar_lea.vmem [#allocation9], 96
      %v226 = vld [vmem:[%s225] sm:$0xff]
      %v227 = vld [vmem:[%s225 + $0x8] sm:$0xff]
      %v228 = vstv %s82
      %v229 = vmul.f32 %v228, %v226
      %v230 = vmul.f32 %v228, %v227
      %v231 = vadd.f32 %v223, %v229
      %v232 = vadd.f32 %v224, %v230
      %s233 = scalar_lea.vmem [#allocation9], 112
      %v234 = vld [vmem:[%s233] sm:$0xff]
      %v235 = vld [vmem:[%s233 + $0x8] sm:$0xff]
      %v236 = vstv %s83
      %v237 = vmul.f32 %v236, %v234
      %v238 = vmul.f32 %v236, %v235
      %v239 = vadd.f32 %v231, %v237
      %v240 = vadd.f32 %v232, %v238
      %s241 = scalar_lea.vmem [#allocation9], 128
      %v242 = vld [vmem:[%s241] sm:$0xff]
      %v243 = vld [vmem:[%s241 + $0x8] sm:$0xff]
      %v244 = vstv %s84
      %v245 = vmul.f32 %v244, %v242
      %v246 = vmul.f32 %v244, %v243
      %v247 = vadd.f32 %v239, %v245
      %v248 = vadd.f32 %v240, %v246
      %s249 = scalar_lea.vmem [#allocation9], 144
      %v250 = vld [vmem:[%s249] sm:$0xff]
      %v251 = vld [vmem:[%s249 + $0x8] sm:$0xff]
      %v252 = vstv %s85
      %v253 = vmul.f32 %v252, %v250
      %v254 = vmul.f32 %v252, %v251
      %v255 = vadd.f32 %v247, %v253
      %v256 = vadd.f32 %v248, %v254
      %s257 = scalar_lea.vmem [#allocation9], 160
      %v258 = vld [vmem:[%s257] sm:$0xff]
      %v259 = vld [vmem:[%s257 + $0x8] sm:$0xff]
      %v260 = vstv %s86
      %v261 = vmul.f32 %v260, %v258
      %v262 = vmul.f32 %v260, %v259
      %v263 = vadd.f32 %v255, %v261
      %v264 = vadd.f32 %v256, %v262
      %s265 = scalar_lea.vmem [#allocation9], 176
      %v266 = vld [vmem:[%s265] sm:$0xff]
      %v267 = vld [vmem:[%s265 + $0x8] sm:$0xff]
      %v268 = vstv %s87
      %v269 = vmul.f32 %v268, %v266
      %v270 = vmul.f32 %v268, %v267
      %v271 = vadd.f32 %v263, %v269
      %v272 = vadd.f32 %v264, %v270
      %s273 = scalar_lea.vmem [#allocation9], 192
      %v274 = vld [vmem:[%s273] sm:$0xff]
      %v275 = vld [vmem:[%s273 + $0x8] sm:$0xff]
      %v276 = vstv %s88
      %v277 = vmul.f32 %v276, %v274
      %v278 = vmul.f32 %v276, %v275
      %v279 = vadd.f32 %v271, %v277
      %v280 = vadd.f32 %v272, %v278
      %s281 = scalar_lea.vmem [#allocation9], 208
      %v282 = vld [vmem:[%s281] sm:$0xff]
      %v283 = vld [vmem:[%s281 + $0x8] sm:$0xff]
      %v284 = vstv %s89
      %v285 = vmul.f32 %v284, %v282
      %v286 = vmul.f32 %v284, %v283
      %v287 = vadd.f32 %v279, %v285
      %v288 = vadd.f32 %v280, %v286
      %s289 = scalar_lea.vmem [#allocation9], 224
      %v290 = vld [vmem:[%s289] sm:$0xff]
      %v291 = vld [vmem:[%s289 + $0x8] sm:$0xff]
      %v292 = vstv %s90
      %v293 = vmul.f32 %v292, %v290
      %v294 = vmul.f32 %v292, %v291
      %v295 = vadd.f32 %v287, %v293
      %v296 = vadd.f32 %v288, %v294
      %s297 = scalar_lea.vmem [#allocation9], 240
      %v298 = vld [vmem:[%s297] sm:$0xff]
      %v299 = vld [vmem:[%s297 + $0x8] sm:$0xff]
      %v300 = vstv %s91
      %v301 = vmul.f32 %v300, %v298
      %v302 = vmul.f32 %v300, %v299
      %v303 = vadd.f32 %v295, %v301
      %v304 = vadd.f32 %v296, %v302
      %s305 = scalar_lea.vmem [#allocation9], 256
      %v306 = vld [vmem:[%s305] sm:$0xff]
      %v307 = vld [vmem:[%s305 + $0x8] sm:$0xff]
      %v308 = vstv %s92
      %v309 = vmul.f32 %v308, %v306
      %v310 = vmul.f32 %v308, %v307
      %v311 = vadd.f32 %v303, %v309
      %v312 = vadd.f32 %v304, %v310
      %s313 = scalar_lea.vmem [#allocation9], 272
      %v314 = vld [vmem:[%s313] sm:$0xff]
      %v315 = vld [vmem:[%s313 + $0x8] sm:$0xff]
      %v316 = vstv %s93
      %v317 = vmul.f32 %v316, %v314
      %v318 = vmul.f32 %v316, %v315
      %v319 = vadd.f32 %v311, %v317
      %v320 = vadd.f32 %v312, %v318
      %s321 = scalar_lea.vmem [#allocation9], 288
      %v322 = vld [vmem:[%s321] sm:$0xff]
      %v323 = vld [vmem:[%s321 + $0x8] sm:$0xff]
      %v324 = vstv %s94
      %v325 = vmul.f32 %v324, %v322
      %v326 = vmul.f32 %v324, %v323
      %v327 = vadd.f32 %v319, %v325
      %v328 = vadd.f32 %v320, %v326
      %s329 = scalar_lea.vmem [#allocation9], 304
      %v330 = vld [vmem:[%s329] sm:$0xff]
      %v331 = vld [vmem:[%s329 + $0x8] sm:$0xff]
      %v332 = vstv %s95
      %v333 = vmul.f32 %v332, %v330
      %v334 = vmul.f32 %v332, %v331
      %v335 = vadd.f32 %v327, %v333
      %v336 = vadd.f32 %v328, %v334
      %s337 = scalar_lea.vmem [#allocation9], 320
      %v338 = vld [vmem:[%s337] sm:$0xff]
      %v339 = vld [vmem:[%s337 + $0x8] sm:$0xff]
      %v340 = vstv %s96
      %v341 = vmul.f32 %v340, %v338
      %v342 = vmul.f32 %v340, %v339
      %v343 = vadd.f32 %v335, %v341
      %v344 = vadd.f32 %v336, %v342
      %s345 = scalar_lea.vmem [#allocation9], 336
      %v346 = vld [vmem:[%s345] sm:$0xff]
      %v347 = vld [vmem:[%s345 + $0x8] sm:$0xff]
      %v348 = vstv %s97
      %v349 = vmul.f32 %v348, %v346
      %v350 = vmul.f32 %v348, %v347
      %v351 = vadd.f32 %v343, %v349
      %v352 = vadd.f32 %v344, %v350
      %s353 = scalar_lea.vmem [#allocation9], 352
      %v354 = vld [vmem:[%s353] sm:$0xff]
      %v355 = vld [vmem:[%s353 + $0x8] sm:$0xff]
      %v356 = vstv %s98
      %v357 = vmul.f32 %v356, %v354
      %v358 = vmul.f32 %v356, %v355
      %v359 = vadd.f32 %v351, %v357
      %v360 = vadd.f32 %v352, %v358
      %s361 = scalar_lea.vmem [#allocation9], 368
      %v362 = vld [vmem:[%s361] sm:$0xff]
      %v363 = vld [vmem:[%s361 + $0x8] sm:$0xff]
      %v364 = vstv %s99
      %v365 = vmul.f32 %v364, %v362
      %v366 = vmul.f32 %v364, %v363
      %v367 = vadd.f32 %v359, %v365
      %v368 = vadd.f32 %v360, %v366
      %s369 = scalar_lea.vmem [#allocation9], 384
      %v370 = vld [vmem:[%s369] sm:$0xff]
      %v371 = vld [vmem:[%s369 + $0x8] sm:$0xff]
      %v372 = vstv %s100
      %v373 = vmul.f32 %v372, %v370
      %v374 = vmul.f32 %v372, %v371
      %v375 = vadd.f32 %v367, %v373
      %v376 = vadd.f32 %v368, %v374
      %v377 = vstv %s176
      %v378 = vadd.f32 %v375, %v377
      %v379 = vadd.f32 %v376, %v377
      %vm380 = vcmp.ge.f32.partialorder %v378, 0.0
      %vm381 = vcmp.ge.f32.partialorder %v379, 0.0
      %v382 = vmul.f32 %v378, 0.01
      %v383 = vmul.f32 %v379, 0.01
      %v384 = vsel %vm380, %v378, %v382
      %v385 = vsel %vm381, %v379, %v383
      %386 = vst [vmem:[#allocation2] sm:$0xff] %v384
      %387 = vst [vmem:[#allocation2 + $0x8] sm:$0xff] %v385
      %v388 = vld [vmem:[#allocation9] sm:$0xff]
      %v389 = vld [vmem:[#allocation9 + $0x8] sm:$0xff]
      %v390 = vstv %s101
      %v391 = vmul.f32 %v390, %v388
      %v392 = vmul.f32 %v390, %v389
      %v393 = vld [vmem:[%s185] sm:$0xff]
      %v394 = vld [vmem:[%s185 + $0x8] sm:$0xff]
      %v395 = vstv %s102
      %v396 = vmul.f32 %v395, %v393
      %v397 = vmul.f32 %v395, %v394
      %v398 = vadd.f32 %v391, %v396
      %v399 = vadd.f32 %v392, %v397
      %v400 = vld [vmem:[%s193] sm:$0xff]
      %v401 = vld [vmem:[%s193 + $0x8] sm:$0xff]
      %v402 = vstv %s103
      %v403 = vmul.f32 %v402, %v400
      %v404 = vmul.f32 %v402, %v401
      %v405 = vadd.f32 %v398, %v403
      %v406 = vadd.f32 %v399, %v404
      %v407 = vld [vmem:[%s201] sm:$0xff]
      %v408 = vld [vmem:[%s201 + $0x8] sm:$0xff]
      %v409 = vstv %s104
      %v410 = vmul.f32 %v409, %v407
      %v411 = vmul.f32 %v409, %v408
      %v412 = vadd.f32 %v405, %v410
      %v413 = vadd.f32 %v406, %v411
      %v414 = vld [vmem:[%s209] sm:$0xff]
      %v415 = vld [vmem:[%s209 + $0x8] sm:$0xff]
      %v416 = vstv %s105
      %v417 = vmul.f32 %v416, %v414
      %v418 = vmul.f32 %v416, %v415
      %v419 = vadd.f32 %v412, %v417
      %v420 = vadd.f32 %v413, %v418
      %v421 = vld [vmem:[%s217] sm:$0xff]
      %v422 = vld [vmem:[%s217 + $0x8] sm:$0xff]
      %v423 = vstv %s106
      %v424 = vmul.f32 %v423, %v421
      %v425 = vmul.f32 %v423, %v422
      %v426 = vadd.f32 %v419, %v424
      %v427 = vadd.f32 %v420, %v425
      %v428 = vld [vmem:[%s225] sm:$0xff]
      %v429 = vld [vmem:[%s225 + $0x8] sm:$0xff]
      %v430 = vstv %s107
      %v431 = vmul.f32 %v430, %v428
      %v432 = vmul.f32 %v430, %v429
      %v433 = vadd.f32 %v426, %v431
      %v434 = vadd.f32 %v427, %v432
      %v435 = vld [vmem:[%s233] sm:$0xff]
      %v436 = vld [vmem:[%s233 + $0x8] sm:$0xff]
      %v437 = vstv %s108
      %v438 = vmul.f32 %v437, %v435
      %v439 = vmul.f32 %v437, %v436
      %v440 = vadd.f32 %v433, %v438
      %v441 = vadd.f32 %v434, %v439
      %v442 = vld [vmem:[%s241] sm:$0xff]
      %v443 = vld [vmem:[%s241 + $0x8] sm:$0xff]
      %v444 = vstv %s109
      %v445 = vmul.f32 %v444, %v442
      %v446 = vmul.f32 %v444, %v443
      %v447 = vadd.f32 %v440, %v445
      %v448 = vadd.f32 %v441, %v446
      %v449 = vld [vmem:[%s249] sm:$0xff]
      %v450 = vld [vmem:[%s249 + $0x8] sm:$0xff]
      %v451 = vstv %s110
      %v452 = vmul.f32 %v451, %v449
      %v453 = vmul.f32 %v451, %v450
      %v454 = vadd.f32 %v447, %v452
      %v455 = vadd.f32 %v448, %v453
      %v456 = vld [vmem:[%s257] sm:$0xff]
      %v457 = vld [vmem:[%s257 + $0x8] sm:$0xff]
      %v458 = vstv %s111
      %v459 = vmul.f32 %v458, %v456
      %v460 = vmul.f32 %v458, %v457
      %v461 = vadd.f32 %v454, %v459
      %v462 = vadd.f32 %v455, %v460
      %v463 = vld [vmem:[%s265] sm:$0xff]
      %v464 = vld [vmem:[%s265 + $0x8] sm:$0xff]
      %v465 = vstv %s112
      %v466 = vmul.f32 %v465, %v463
      %v467 = vmul.f32 %v465, %v464
      %v468 = vadd.f32 %v461, %v466
      %v469 = vadd.f32 %v462, %v467
      %v470 = vld [vmem:[%s273] sm:$0xff]
      %v471 = vld [vmem:[%s273 + $0x8] sm:$0xff]
      %v472 = vstv %s113
      %v473 = vmul.f32 %v472, %v470
      %v474 = vmul.f32 %v472, %v471
      %v475 = vadd.f32 %v468, %v473
      %v476 = vadd.f32 %v469, %v474
      %v477 = vld [vmem:[%s281] sm:$0xff]
      %v478 = vld [vmem:[%s281 + $0x8] sm:$0xff]
      %v479 = vstv %s114
      %v480 = vmul.f32 %v479, %v477
      %v481 = vmul.f32 %v479, %v478
      %v482 = vadd.f32 %v475, %v480
      %v483 = vadd.f32 %v476, %v481
      %v484 = vld [vmem:[%s289] sm:$0xff]
      %v485 = vld [vmem:[%s289 + $0x8] sm:$0xff]
      %v486 = vstv %s115
      %v487 = vmul.f32 %v486, %v484
      %v488 = vmul.f32 %v486, %v485
      %v489 = vadd.f32 %v482, %v487
      %v490 = vadd.f32 %v483, %v488
      %v491 = vld [vmem:[%s297] sm:$0xff]
      %v492 = vld [vmem:[%s297 + $0x8] sm:$0xff]
      %v493 = vstv %s116
      %v494 = vmul.f32 %v493, %v491
      %v495 = vmul.f32 %v493, %v492
      %v496 = vadd.f32 %v489, %v494
      %v497 = vadd.f32 %v490, %v495
      %v498 = vld [vmem:[%s305] sm:$0xff]
      %v499 = vld [vmem:[%s305 + $0x8] sm:$0xff]
      %v500 = vstv %s117
      %v501 = vmul.f32 %v500, %v498
      %v502 = vmul.f32 %v500, %v499
      %v503 = vadd.f32 %v496, %v501
      %v504 = vadd.f32 %v497, %v502
      %v505 = vld [vmem:[%s313] sm:$0xff]
      %v506 = vld [vmem:[%s313 + $0x8] sm:$0xff]
      %v507 = vstv %s118
      %v508 = vmul.f32 %v507, %v505
      %v509 = vmul.f32 %v507, %v506
      %v510 = vadd.f32 %v503, %v508
      %v511 = vadd.f32 %v504, %v509
      %v512 = vld [vmem:[%s321] sm:$0xff]
      %v513 = vld [vmem:[%s321 + $0x8] sm:$0xff]
      %v514 = vstv %s119
      %v515 = vmul.f32 %v514, %v512
      %v516 = vmul.f32 %v514, %v513
      %v517 = vadd.f32 %v510, %v515
      %v518 = vadd.f32 %v511, %v516
      %v519 = vld [vmem:[%s329] sm:$0xff]
      %v520 = vld [vmem:[%s329 + $0x8] sm:$0xff]
      %v521 = vstv %s120
      %v522 = vmul.f32 %v521, %v519
      %v523 = vmul.f32 %v521, %v520
      %v524 = vadd.f32 %v517, %v522
      %v525 = vadd.f32 %v518, %v523
      %v526 = vld [vmem:[%s337] sm:$0xff]
      %v527 = vld [vmem:[%s337 + $0x8] sm:$0xff]
      %v528 = vstv %s121
      %v529 = vmul.f32 %v528, %v526
      %v530 = vmul.f32 %v528, %v527
      %v531 = vadd.f32 %v524, %v529
      %v532 = vadd.f32 %v525, %v530
      %v533 = vld [vmem:[%s345] sm:$0xff]
      %v534 = vld [vmem:[%s345 + $0x8] sm:$0xff]
      %v535 = vstv %s122
      %v536 = vmul.f32 %v535, %v533
      %v537 = vmul.f32 %v535, %v534
      %v538 = vadd.f32 %v531, %v536
      %v539 = vadd.f32 %v532, %v537
      %v540 = vld [vmem:[%s353] sm:$0xff]
      %v541 = vld [vmem:[%s353 + $0x8] sm:$0xff]
      %v542 = vstv %s123
      %v543 = vmul.f32 %v542, %v540
      %v544 = vmul.f32 %v542, %v541
      %v545 = vadd.f32 %v538, %v543
      %v546 = vadd.f32 %v539, %v544
      %v547 = vld [vmem:[%s361] sm:$0xff]
      %v548 = vld [vmem:[%s361 + $0x8] sm:$0xff]
      %v549 = vstv %s124
      %v550 = vmul.f32 %v549, %v547
      %v551 = vmul.f32 %v549, %v548
      %v552 = vadd.f32 %v545, %v550
      %v553 = vadd.f32 %v546, %v551
      %v554 = vld [vmem:[%s369] sm:$0xff]
      %v555 = vld [vmem:[%s369 + $0x8] sm:$0xff]
      %v556 = vstv %s125
      %v557 = vmul.f32 %v556, %v554
      %v558 = vmul.f32 %v556, %v555
      %v559 = vadd.f32 %v552, %v557
      %v560 = vadd.f32 %v553, %v558
      %v561 = vstv %s177
      %v562 = vadd.f32 %v559, %v561
      %v563 = vadd.f32 %v560, %v561
      %vm564 = vcmp.ge.f32.partialorder %v562, 0.0
      %vm565 = vcmp.ge.f32.partialorder %v563, 0.0
      %v566 = vmul.f32 %v562, 0.01
      %v567 = vmul.f32 %v563, 0.01
      %v568 = vsel %vm564, %v562, %v566
      %v569 = vsel %vm565, %v563, %v567
      %570 = vst [vmem:[#allocation2 + $0x10] sm:$0xff] %v568
      %571 = vst [vmem:[#allocation2 + $0x18] sm:$0xff] %v569
      %v572 = vld [vmem:[#allocation9] sm:$0xff]
      %v573 = vld [vmem:[#allocation9 + $0x8] sm:$0xff]
      %v574 = vstv %s126
      %v575 = vmul.f32 %v574, %v572
      %v576 = vmul.f32 %v574, %v573
      %v577 = vld [vmem:[%s185] sm:$0xff]
      %v578 = vld [vmem:[%s185 + $0x8] sm:$0xff]
      %v579 = vstv %s127
      %v580 = vmul.f32 %v579, %v577
      %v581 = vmul.f32 %v579, %v578
      %v582 = vadd.f32 %v575, %v580
      %v583 = vadd.f32 %v576, %v581
      %v584 = vld [vmem:[%s193] sm:$0xff]
      %v585 = vld [vmem:[%s193 + $0x8] sm:$0xff]
      %v586 = vstv %s128
      %v587 = vmul.f32 %v586, %v584
      %v588 = vmul.f32 %v586, %v585
      %v589 = vadd.f32 %v582, %v587
      %v590 = vadd.f32 %v583, %v588
      %v591 = vld [vmem:[%s201] sm:$0xff]
      %v592 = vld [vmem:[%s201 + $0x8] sm:$0xff]
      %v593 = vstv %s129
      %v594 = vmul.f32 %v593, %v591
      %v595 = vmul.f32 %v593, %v592
      %v596 = vadd.f32 %v589, %v594
      %v597 = vadd.f32 %v590, %v595
      %v598 = vld [vmem:[%s209] sm:$0xff]
      %v599 = vld [vmem:[%s209 + $0x8] sm:$0xff]
      %v600 = vstv %s130
      %v601 = vmul.f32 %v600, %v598
      %v602 = vmul.f32 %v600, %v599
      %v603 = vadd.f32 %v596, %v601
      %v604 = vadd.f32 %v597, %v602
      %v605 = vld [vmem:[%s217] sm:$0xff]
      %v606 = vld [vmem:[%s217 + $0x8] sm:$0xff]
      %v607 = vstv %s131
      %v608 = vmul.f32 %v607, %v605
      %v609 = vmul.f32 %v607, %v606
      %v610 = vadd.f32 %v603, %v608
      %v611 = vadd.f32 %v604, %v609
      %v612 = vld [vmem:[%s225] sm:$0xff]
      %v613 = vld [vmem:[%s225 + $0x8] sm:$0xff]
      %v614 = vstv %s132
      %v615 = vmul.f32 %v614, %v612
      %v616 = vmul.f32 %v614, %v613
      %v617 = vadd.f32 %v610, %v615
      %v618 = vadd.f32 %v611, %v616
      %v619 = vld [vmem:[%s233] sm:$0xff]
      %v620 = vld [vmem:[%s233 + $0x8] sm:$0xff]
      %v621 = vstv %s133
      %v622 = vmul.f32 %v621, %v619
      %v623 = vmul.f32 %v621, %v620
      %v624 = vadd.f32 %v617, %v622
      %v625 = vadd.f32 %v618, %v623
      %v626 = vld [vmem:[%s241] sm:$0xff]
      %v627 = vld [vmem:[%s241 + $0x8] sm:$0xff]
      %v628 = vstv %s134
      %v629 = vmul.f32 %v628, %v626
      %v630 = vmul.f32 %v628, %v627
      %v631 = vadd.f32 %v624, %v629
      %v632 = vadd.f32 %v625, %v630
      %v633 = vld [vmem:[%s249] sm:$0xff]
      %v634 = vld [vmem:[%s249 + $0x8] sm:$0xff]
      %v635 = vstv %s135
      %v636 = vmul.f32 %v635, %v633
      %v637 = vmul.f32 %v635, %v634
      %v638 = vadd.f32 %v631, %v636
      %v639 = vadd.f32 %v632, %v637
      %v640 = vld [vmem:[%s257] sm:$0xff]
      %v641 = vld [vmem:[%s257 + $0x8] sm:$0xff]
      %v642 = vstv %s136
      %v643 = vmul.f32 %v642, %v640
      %v644 = vmul.f32 %v642, %v641
      %v645 = vadd.f32 %v638, %v643
      %v646 = vadd.f32 %v639, %v644
      %v647 = vld [vmem:[%s265] sm:$0xff]
      %v648 = vld [vmem:[%s265 + $0x8] sm:$0xff]
      %v649 = vstv %s137
      %v650 = vmul.f32 %v649, %v647
      %v651 = vmul.f32 %v649, %v648
      %v652 = vadd.f32 %v645, %v650
      %v653 = vadd.f32 %v646, %v651
      %v654 = vld [vmem:[%s273] sm:$0xff]
      %v655 = vld [vmem:[%s273 + $0x8] sm:$0xff]
      %v656 = vstv %s138
      %v657 = vmul.f32 %v656, %v654
      %v658 = vmul.f32 %v656, %v655
      %v659 = vadd.f32 %v652, %v657
      %v660 = vadd.f32 %v653, %v658
      %v661 = vld [vmem:[%s281] sm:$0xff]
      %v662 = vld [vmem:[%s281 + $0x8] sm:$0xff]
      %v663 = vstv %s139
      %v664 = vmul.f32 %v663, %v661
      %v665 = vmul.f32 %v663, %v662
      %v666 = vadd.f32 %v659, %v664
      %v667 = vadd.f32 %v660, %v665
      %v668 = vld [vmem:[%s289] sm:$0xff]
      %v669 = vld [vmem:[%s289 + $0x8] sm:$0xff]
      %v670 = vstv %s140
      %v671 = vmul.f32 %v670, %v668
      %v672 = vmul.f32 %v670, %v669
      %v673 = vadd.f32 %v666, %v671
      %v674 = vadd.f32 %v667, %v672
      %v675 = vld [vmem:[%s297] sm:$0xff]
      %v676 = vld [vmem:[%s297 + $0x8] sm:$0xff]
      %v677 = vstv %s141
      %v678 = vmul.f32 %v677, %v675
      %v679 = vmul.f32 %v677, %v676
      %v680 = vadd.f32 %v673, %v678
      %v681 = vadd.f32 %v674, %v679
      %v682 = vld [vmem:[%s305] sm:$0xff]
      %v683 = vld [vmem:[%s305 + $0x8] sm:$0xff]
      %v684 = vstv %s142
      %v685 = vmul.f32 %v684, %v682
      %v686 = vmul.f32 %v684, %v683
      %v687 = vadd.f32 %v680, %v685
      %v688 = vadd.f32 %v681, %v686
      %v689 = vld [vmem:[%s313] sm:$0xff]
      %v690 = vld [vmem:[%s313 + $0x8] sm:$0xff]
      %v691 = vstv %s143
      %v692 = vmul.f32 %v691, %v689
      %v693 = vmul.f32 %v691, %v690
      %v694 = vadd.f32 %v687, %v692
      %v695 = vadd.f32 %v688, %v693
      %v696 = vld [vmem:[%s321] sm:$0xff]
      %v697 = vld [vmem:[%s321 + $0x8] sm:$0xff]
      %v698 = vstv %s144
      %v699 = vmul.f32 %v698, %v696
      %v700 = vmul.f32 %v698, %v697
      %v701 = vadd.f32 %v694, %v699
      %v702 = vadd.f32 %v695, %v700
      %v703 = vld [vmem:[%s329] sm:$0xff]
      %v704 = vld [vmem:[%s329 + $0x8] sm:$0xff]
      %v705 = vstv %s145
      %v706 = vmul.f32 %v705, %v703
      %v707 = vmul.f32 %v705, %v704
      %v708 = vadd.f32 %v701, %v706
      %v709 = vadd.f32 %v702, %v707
      %v710 = vld [vmem:[%s337] sm:$0xff]
      %v711 = vld [vmem:[%s337 + $0x8] sm:$0xff]
      %v712 = vstv %s146
      %v713 = vmul.f32 %v712, %v710
      %v714 = vmul.f32 %v712, %v711
      %v715 = vadd.f32 %v708, %v713
      %v716 = vadd.f32 %v709, %v714
      %v717 = vld [vmem:[%s345] sm:$0xff]
      %v718 = vld [vmem:[%s345 + $0x8] sm:$0xff]
      %v719 = vstv %s147
      %v720 = vmul.f32 %v719, %v717
      %v721 = vmul.f32 %v719, %v718
      %v722 = vadd.f32 %v715, %v720
      %v723 = vadd.f32 %v716, %v721
      %v724 = vld [vmem:[%s353] sm:$0xff]
      %v725 = vld [vmem:[%s353 + $0x8] sm:$0xff]
      %v726 = vstv %s148
      %v727 = vmul.f32 %v726, %v724
      %v728 = vmul.f32 %v726, %v725
      %v729 = vadd.f32 %v722, %v727
      %v730 = vadd.f32 %v723, %v728
      %v731 = vld [vmem:[%s361] sm:$0xff]
      %v732 = vld [vmem:[%s361 + $0x8] sm:$0xff]
      %v733 = vstv %s149
      %v734 = vmul.f32 %v733, %v731
      %v735 = vmul.f32 %v733, %v732
      %v736 = vadd.f32 %v729, %v734
      %v737 = vadd.f32 %v730, %v735
      %v738 = vld [vmem:[%s369] sm:$0xff]
      %v739 = vld [vmem:[%s369 + $0x8] sm:$0xff]
      %v740 = vstv %s150
      %v741 = vmul.f32 %v740, %v738
      %v742 = vmul.f32 %v740, %v739
      %v743 = vadd.f32 %v736, %v741
      %v744 = vadd.f32 %v737, %v742
      %v745 = vstv %s178
      %v746 = vadd.f32 %v743, %v745
      %v747 = vadd.f32 %v744, %v745
      %vm748 = vcmp.ge.f32.partialorder %v746, 0.0
      %vm749 = vcmp.ge.f32.partialorder %v747, 0.0
      %v750 = vmul.f32 %v746, 0.01
      %v751 = vmul.f32 %v747, 0.01
      %v752 = vsel %vm748, %v746, %v750
      %v753 = vsel %vm749, %v747, %v751
      %754 = vst [vmem:[#allocation2 + $0x20] sm:$0xff] %v752
      %755 = vst [vmem:[#allocation2 + $0x28] sm:$0xff] %v753
      %v756 = vld [vmem:[#allocation9] sm:$0xff]
      %v757 = vld [vmem:[#allocation9 + $0x8] sm:$0xff]
      %v758 = vstv %s151
      %v759 = vmul.f32 %v758, %v756
      %v760 = vmul.f32 %v758, %v757
      %v761 = vld [vmem:[%s185] sm:$0xff]
      %v762 = vld [vmem:[%s185 + $0x8] sm:$0xff]
      %v763 = vstv %s152
      %v764 = vmul.f32 %v763, %v761
      %v765 = vmul.f32 %v763, %v762
      %v766 = vadd.f32 %v759, %v764
      %v767 = vadd.f32 %v760, %v765
      %v768 = vld [vmem:[%s193] sm:$0xff]
      %v769 = vld [vmem:[%s193 + $0x8] sm:$0xff]
      %v770 = vstv %s153
      %v771 = vmul.f32 %v770, %v768
      %v772 = vmul.f32 %v770, %v769
      %v773 = vadd.f32 %v766, %v771
      %v774 = vadd.f32 %v767, %v772
      %v775 = vld [vmem:[%s201] sm:$0xff]
      %v776 = vld [vmem:[%s201 + $0x8] sm:$0xff]
      %v777 = vstv %s154
      %v778 = vmul.f32 %v777, %v775
      %v779 = vmul.f32 %v777, %v776
      %v780 = vadd.f32 %v773, %v778
      %v781 = vadd.f32 %v774, %v779
      %v782 = vld [vmem:[%s209] sm:$0xff]
      %v783 = vld [vmem:[%s209 + $0x8] sm:$0xff]
      %v784 = vstv %s155
      %v785 = vmul.f32 %v784, %v782
      %v786 = vmul.f32 %v784, %v783
      %v787 = vadd.f32 %v780, %v785
      %v788 = vadd.f32 %v781, %v786
      %v789 = vld [vmem:[%s217] sm:$0xff]
      %v790 = vld [vmem:[%s217 + $0x8] sm:$0xff]
      %v791 = vstv %s156
      %v792 = vmul.f32 %v791, %v789
      %v793 = vmul.f32 %v791, %v790
      %v794 = vadd.f32 %v787, %v792
      %v795 = vadd.f32 %v788, %v793
      %v796 = vld [vmem:[%s225] sm:$0xff]
      %v797 = vld [vmem:[%s225 + $0x8] sm:$0xff]
      %v798 = vstv %s157
      %v799 = vmul.f32 %v798, %v796
      %v800 = vmul.f32 %v798, %v797
      %v801 = vadd.f32 %v794, %v799
      %v802 = vadd.f32 %v795, %v800
      %v803 = vld [vmem:[%s233] sm:$0xff]
      %v804 = vld [vmem:[%s233 + $0x8] sm:$0xff]
      %v805 = vstv %s158
      %v806 = vmul.f32 %v805, %v803
      %v807 = vmul.f32 %v805, %v804
      %v808 = vadd.f32 %v801, %v806
      %v809 = vadd.f32 %v802, %v807
      %v810 = vld [vmem:[%s241] sm:$0xff]
      %v811 = vld [vmem:[%s241 + $0x8] sm:$0xff]
      %v812 = vstv %s159
      %v813 = vmul.f32 %v812, %v810
      %v814 = vmul.f32 %v812, %v811
      %v815 = vadd.f32 %v808, %v813
      %v816 = vadd.f32 %v809, %v814
      %v817 = vld [vmem:[%s249] sm:$0xff]
      %v818 = vld [vmem:[%s249 + $0x8] sm:$0xff]
      %v819 = vstv %s160
      %v820 = vmul.f32 %v819, %v817
      %v821 = vmul.f32 %v819, %v818
      %v822 = vadd.f32 %v815, %v820
      %v823 = vadd.f32 %v816, %v821
      %v824 = vld [vmem:[%s257] sm:$0xff]
      %v825 = vld [vmem:[%s257 + $0x8] sm:$0xff]
      %v826 = vstv %s161
      %v827 = vmul.f32 %v826, %v824
      %v828 = vmul.f32 %v826, %v825
      %v829 = vadd.f32 %v822, %v827
      %v830 = vadd.f32 %v823, %v828
      %v831 = vld [vmem:[%s265] sm:$0xff]
      %v832 = vld [vmem:[%s265 + $0x8] sm:$0xff]
      %v833 = vstv %s162
      %v834 = vmul.f32 %v833, %v831
      %v835 = vmul.f32 %v833, %v832
      %v836 = vadd.f32 %v829, %v834
      %v837 = vadd.f32 %v830, %v835
      %v838 = vld [vmem:[%s273] sm:$0xff]
      %v839 = vld [vmem:[%s273 + $0x8] sm:$0xff]
      %v840 = vstv %s163
      %v841 = vmul.f32 %v840, %v838
      %v842 = vmul.f32 %v840, %v839
      %v843 = vadd.f32 %v836, %v841
      %v844 = vadd.f32 %v837, %v842
      %v845 = vld [vmem:[%s281] sm:$0xff]
      %v846 = vld [vmem:[%s281 + $0x8] sm:$0xff]
      %v847 = vstv %s164
      %v848 = vmul.f32 %v847, %v845
      %v849 = vmul.f32 %v847, %v846
      %v850 = vadd.f32 %v843, %v848
      %v851 = vadd.f32 %v844, %v849
      %v852 = vld [vmem:[%s289] sm:$0xff]
      %v853 = vld [vmem:[%s289 + $0x8] sm:$0xff]
      %v854 = vstv %s165
      %v855 = vmul.f32 %v854, %v852
      %v856 = vmul.f32 %v854, %v853
      %v857 = vadd.f32 %v850, %v855
      %v858 = vadd.f32 %v851, %v856
      %v859 = vld [vmem:[%s297] sm:$0xff]
      %v860 = vld [vmem:[%s297 + $0x8] sm:$0xff]
      %v861 = vstv %s166
      %v862 = vmul.f32 %v861, %v859
      %v863 = vmul.f32 %v861, %v860
      %v864 = vadd.f32 %v857, %v862
      %v865 = vadd.f32 %v858, %v863
      %v866 = vld [vmem:[%s305] sm:$0xff]
      %v867 = vld [vmem:[%s305 + $0x8] sm:$0xff]
      %v868 = vstv %s167
      %v869 = vmul.f32 %v868, %v866
      %v870 = vmul.f32 %v868, %v867
      %v871 = vadd.f32 %v864, %v869
      %v872 = vadd.f32 %v865, %v870
      %v873 = vld [vmem:[%s313] sm:$0xff]
      %v874 = vld [vmem:[%s313 + $0x8] sm:$0xff]
      %v875 = vstv %s168
      %v876 = vmul.f32 %v875, %v873
      %v877 = vmul.f32 %v875, %v874
      %v878 = vadd.f32 %v871, %v876
      %v879 = vadd.f32 %v872, %v877
      %v880 = vld [vmem:[%s321] sm:$0xff]
      %v881 = vld [vmem:[%s321 + $0x8] sm:$0xff]
      %v882 = vstv %s169
      %v883 = vmul.f32 %v882, %v880
      %v884 = vmul.f32 %v882, %v881
      %v885 = vadd.f32 %v878, %v883
      %v886 = vadd.f32 %v879, %v884
      %v887 = vld [vmem:[%s329] sm:$0xff]
      %v888 = vld [vmem:[%s329 + $0x8] sm:$0xff]
      %v889 = vstv %s170
      %v890 = vmul.f32 %v889, %v887
      %v891 = vmul.f32 %v889, %v888
      %v892 = vadd.f32 %v885, %v890
      %v893 = vadd.f32 %v886, %v891
      %v894 = vld [vmem:[%s337] sm:$0xff]
      %v895 = vld [vmem:[%s337 + $0x8] sm:$0xff]
      %v896 = vstv %s171
      %v897 = vmul.f32 %v896, %v894
      %v898 = vmul.f32 %v896, %v895
      %v899 = vadd.f32 %v892, %v897
      %v900 = vadd.f32 %v893, %v898
      %v901 = vld [vmem:[%s345] sm:$0xff]
      %v902 = vld [vmem:[%s345 + $0x8] sm:$0xff]
      %v903 = vstv %s172
      %v904 = vmul.f32 %v903, %v901
      %v905 = vmul.f32 %v903, %v902
      %v906 = vadd.f32 %v899, %v904
      %v907 = vadd.f32 %v900, %v905
      %v908 = vld [vmem:[%s353] sm:$0xff]
      %v909 = vld [vmem:[%s353 + $0x8] sm:$0xff]
      %v910 = vstv %s173
      %v911 = vmul.f32 %v910, %v908
      %v912 = vmul.f32 %v910, %v909
      %v913 = vadd.f32 %v906, %v911
      %v914 = vadd.f32 %v907, %v912
      %v915 = vld [vmem:[%s361] sm:$0xff]
      %v916 = vld [vmem:[%s361 + $0x8] sm:$0xff]
      %v917 = vstv %s174
      %v918 = vmul.f32 %v917, %v915
      %v919 = vmul.f32 %v917, %v916
      %v920 = vadd.f32 %v913, %v918
      %v921 = vadd.f32 %v914, %v919
      %v922 = vld [vmem:[%s369] sm:$0xff]
      %v923 = vld [vmem:[%s369 + $0x8] sm:$0xff]
      %v924 = vstv %s175
      %v925 = vmul.f32 %v924, %v922
      %v926 = vmul.f32 %v924, %v923
      %v927 = vadd.f32 %v920, %v925
      %v928 = vadd.f32 %v921, %v926
      %v929 = vstv %s179
      %v930 = vadd.f32 %v927, %v929
      %v931 = vadd.f32 %v928, %v929
      %vm932 = vcmp.ge.f32.partialorder %v930, 0.0
      %vm933 = vcmp.ge.f32.partialorder %v931, 0.0
      %v934 = vmul.f32 %v930, 0.01
      %v935 = vmul.f32 %v931, 0.01
      %v936 = vsel %vm932, %v930, %v934
      %v937 = vsel %vm933, %v931, %v935
      %938 = vst [vmem:[#allocation2 + $0x30] sm:$0xff] %v936
      %939 = vst [vmem:[#allocation2 + $0x38] sm:$0xff] %v937
    $region41: #{tpu_custom_call.1} parent=1 // pred_fallthru
      _
    %v940 = vld [vmem:[#allocation2] sm:$0xff]
    %v941 = vld [vmem:[#allocation2 + $0x8] sm:$0xff]
    %v942 = vld [vmem:[#allocation2 + $0x10] sm:$0xff]
    %v943 = vld [vmem:[#allocation2 + $0x18] sm:$0xff]
    %v944 = vld [vmem:[#allocation2 + $0x20] sm:$0xff]
    %v945 = vld [vmem:[#allocation2 + $0x28] sm:$0xff]
    %v946 = vld [vmem:[#allocation2 + $0x30] sm:$0xff]
    %v947 = vld [vmem:[#allocation2 + $0x38] sm:$0xff]
    %v948 = vld [vmem:[#allocation10] sm:$0xff]
    %v949 = vld [vmem:[#allocation10 + $0x8] sm:$0xff]
    %v950 = vld [vmem:[#allocation10 + $0x10] sm:$0xff]
    %v951 = vld [vmem:[#allocation10 + $0x18] sm:$0xff]
    %v952 = vld [vmem:[#allocation10 + $0x20] sm:$0xff]
    %v953 = vld [vmem:[#allocation10 + $0x28] sm:$0xff]
    %v954 = vld [vmem:[#allocation10 + $0x30] sm:$0xff]
    %v955 = vld [vmem:[#allocation10 + $0x38] sm:$0xff]
    %v956 = vld [vmem:[#allocation10 + $0x40] sm:$0xff]
    %v957 = vld [vmem:[#allocation10 + $0x48] sm:$0xff]
    %v958 = vld [vmem:[#allocation10 + $0x50] sm:$0xff]
    %v959 = vld [vmem:[#allocation10 + $0x58] sm:$0xff]
    %v960 = vld [vmem:[#allocation10 + $0x60] sm:$0xff]
    %v961 = vld [vmem:[#allocation10 + $0x68] sm:$0xff]
    %v962 = vld [vmem:[#allocation10 + $0x70] sm:$0xff]
    %v963 = vld [vmem:[#allocation10 + $0x78] sm:$0xff]
    %v964 = vld [vmem:[#allocation10 + $0x80] sm:$0xff]
    %v965 = vld [vmem:[#allocation10 + $0x88] sm:$0xff]
    %v966 = vld [vmem:[#allocation10 + $0x90] sm:$0xff]
    %v967 = vld [vmem:[#allocation10 + $0x98] sm:$0xff]
    %v968 = vld [vmem:[#allocation10 + $0xa0] sm:$0xff]
    %v969 = vld [vmem:[#allocation10 + $0xa8] sm:$0xff]
    %v970 = vld [vmem:[#allocation10 + $0xb0] sm:$0xff]
    %v971 = vld [vmem:[#allocation10 + $0xb8] sm:$0xff]
    %v972 = vld [vmem:[#allocation10 + $0xc0] sm:$0xff]
    %v973 = vld [vmem:[#allocation10 + $0xc8] sm:$0xff]
    %v974 = vld [vmem:[#allocation10 + $0xd0] sm:$0xff]
    %v975 = vld [vmem:[#allocation10 + $0xd8] sm:$0xff]
    %v976 = vld [vmem:[#allocation10 + $0xe0] sm:$0xff]
    %v977 = vld [vmem:[#allocation10 + $0xe8] sm:$0xff]
    %v978 = vld [vmem:[#allocation10 + $0xf0] sm:$0xff]
    %v979 = vld [vmem:[#allocation10 + $0xf8] sm:$0xff]
    %v980 = vld [vmem:[#allocation10 + $0x100] sm:$0xff]
    %v981 = vld [vmem:[#allocation10 + $0x108] sm:$0xff]
    %v982 = vld [vmem:[#allocation10 + $0x110] sm:$0xff]
    %v983 = vld [vmem:[#allocation10 + $0x118] sm:$0xff]
    %v984 = vld [vmem:[#allocation10 + $0x120] sm:$0xff]
    %v985 = vld [vmem:[#allocation10 + $0x128] sm:$0xff]
    %v986 = vld [vmem:[#allocation10 + $0x130] sm:$0xff]
    %v987 = vld [vmem:[#allocation10 + $0x138] sm:$0xff]
    %v988 = vld [vmem:[#allocation10 + $0x140] sm:$0xff]
    %v989 = vld [vmem:[#allocation10 + $0x148] sm:$0xff]
    %v990 = vld [vmem:[#allocation10 + $0x150] sm:$0xff]
    %v991 = vld [vmem:[#allocation10 + $0x158] sm:$0xff]
    %v992 = vld [vmem:[#allocation10 + $0x160] sm:$0xff]
    %v993 = vld [vmem:[#allocation10 + $0x168] sm:$0xff]
    %v994 = vld [vmem:[#allocation10 + $0x170] sm:$0xff]
    %v995 = vld [vmem:[#allocation10 + $0x178] sm:$0xff]
    %v996 = vld [vmem:[#allocation10 + $0x180] sm:$0xff]
    %v997 = vld [vmem:[#allocation10 + $0x188] sm:$0xff]
    %v998 = vld [vmem:[#allocation10 + $0x190] sm:$0xff]
    %v999 = vld [vmem:[#allocation10 + $0x198] sm:$0xff]
    %v1000 = vld [vmem:[#allocation10 + $0x1a0] sm:$0xff]
    %v1001 = vld [vmem:[#allocation10 + $0x1a8] sm:$0xff]
    %v1002 = vld [vmem:[#allocation10 + $0x1b0] sm:$0xff]
    %v1003 = vld [vmem:[#allocation10 + $0x1b8] sm:$0xff]
    %v1004 = vld [vmem:[#allocation10 + $0x1c0] sm:$0xff]
    %v1005 = vld [vmem:[#allocation10 + $0x1c8] sm:$0xff]
    %v1006 = vld [vmem:[#allocation10 + $0x1d0] sm:$0xff]
    %v1007 = vld [vmem:[#allocation10 + $0x1d8] sm:$0xff]
    %v1008 = vld [vmem:[#allocation10 + $0x1e0] sm:$0xff]
    %v1009 = vld [vmem:[#allocation10 + $0x1e8] sm:$0xff]
    %v1010 = vld [vmem:[#allocation10 + $0x1f0] sm:$0xff]
    %v1011 = vld [vmem:[#allocation10 + $0x1f8] sm:$0xff]
    %v1012 = vld [vmem:[#allocation10 + $0x200] sm:$0xff]
    %v1013 = vld [vmem:[#allocation10 + $0x208] sm:$0xff]
    %v1014 = vld [vmem:[#allocation10 + $0x210] sm:$0xff]
    %v1015 = vld [vmem:[#allocation10 + $0x218] sm:$0xff]
    %v1016 = vld [vmem:[#allocation10 + $0x220] sm:$0xff]
    %v1017 = vld [vmem:[#allocation10 + $0x228] sm:$0xff]
    %v1018 = vld [vmem:[#allocation10 + $0x230] sm:$0xff]
    %v1019 = vld [vmem:[#allocation10 + $0x238] sm:$0xff]
    %v1020 = vld [vmem:[#allocation10 + $0x240] sm:$0xff]
    %v1021 = vld [vmem:[#allocation10 + $0x248] sm:$0xff]
    %v1022 = vld [vmem:[#allocation10 + $0x250] sm:$0xff]
    %v1023 = vld [vmem:[#allocation10 + $0x258] sm:$0xff]
    %v1024 = vld [vmem:[#allocation10 + $0x260] sm:$0xff]
    %v1025 = vld [vmem:[#allocation10 + $0x268] sm:$0xff]
    %v1026 = vld [vmem:[#allocation10 + $0x270] sm:$0xff]
    %v1027 = vld [vmem:[#allocation10 + $0x278] sm:$0xff]
    %v1028 = vld [vmem:[#allocation10 + $0x280] sm:$0xff]
    %v1029 = vld [vmem:[#allocation10 + $0x288] sm:$0xff]
    %v1030 = vld [vmem:[#allocation10 + $0x290] sm:$0xff]
    %v1031 = vld [vmem:[#allocation10 + $0x298] sm:$0xff]
    %v1032 = vld [vmem:[#allocation10 + $0x2a0] sm:$0xff]
    %v1033 = vld [vmem:[#allocation10 + $0x2a8] sm:$0xff]
    %v1034 = vld [vmem:[#allocation10 + $0x2b0] sm:$0xff]
    %v1035 = vld [vmem:[#allocation10 + $0x2b8] sm:$0xff]
    %v1036 = vld [vmem:[#allocation10 + $0x2c0] sm:$0xff]
    %v1037 = vld [vmem:[#allocation10 + $0x2c8] sm:$0xff]
    %v1038 = vld [vmem:[#allocation10 + $0x2d0] sm:$0xff]
    %v1039 = vld [vmem:[#allocation10 + $0x2d8] sm:$0xff]
    %v1040 = vld [vmem:[#allocation10 + $0x2e0] sm:$0xff]
    %v1041 = vld [vmem:[#allocation10 + $0x2e8] sm:$0xff]
    %v1042 = vld [vmem:[#allocation10 + $0x2f0] sm:$0xff]
    %v1043 = vld [vmem:[#allocation10 + $0x2f8] sm:$0xff]
    %v1044 = vld [vmem:[#allocation10 + $0x300] sm:$0xff]
    %v1045 = vld [vmem:[#allocation10 + $0x308] sm:$0xff]
    %v1046 = vld [vmem:[#allocation10 + $0x310] sm:$0xff]
    %v1047 = vld [vmem:[#allocation10 + $0x318] sm:$0xff]
    %v1048 = vld [vmem:[#allocation10 + $0x320] sm:$0xff]
    %v1049 = vld [vmem:[#allocation10 + $0x328] sm:$0xff]
    %v1050 = vld [vmem:[#allocation10 + $0x330] sm:$0xff]
    %v1051 = vld [vmem:[#allocation10 + $0x338] sm:$0xff]
    %v1052 = vld [vmem:[#allocation10 + $0x340] sm:$0xff]
    %v1053 = vld [vmem:[#allocation10 + $0x348] sm:$0xff]
    %v1054 = vld [vmem:[#allocation10 + $0x350] sm:$0xff]
    %v1055 = vld [vmem:[#allocation10 + $0x358] sm:$0xff]
    %v1056 = vld [vmem:[#allocation10 + $0x360] sm:$0xff]
    %v1057 = vld [vmem:[#allocation10 + $0x368] sm:$0xff]
    %v1058 = vld [vmem:[#allocation10 + $0x370] sm:$0xff]
    %v1059 = vld [vmem:[#allocation10 + $0x378] sm:$0xff]
    %v1060 = vld [vmem:[#allocation10 + $0x380] sm:$0xff]
    %v1061 = vld [vmem:[#allocation10 + $0x388] sm:$0xff]
    %v1062 = vld [vmem:[#allocation10 + $0x390] sm:$0xff]
    %v1063 = vld [vmem:[#allocation10 + $0x398] sm:$0xff]
    %v1064 = vld [vmem:[#allocation10 + $0x3a0] sm:$0xff]
    %v1065 = vld [vmem:[#allocation10 + $0x3a8] sm:$0xff]
    %v1066 = vld [vmem:[#allocation10 + $0x3b0] sm:$0xff]
    %v1067 = vld [vmem:[#allocation10 + $0x3b8] sm:$0xff]
    %v1068 = vld [vmem:[#allocation10 + $0x3c0] sm:$0xff]
    %v1069 = vld [vmem:[#allocation10 + $0x3c8] sm:$0xff]
    %v1070 = vld [vmem:[#allocation10 + $0x3d0] sm:$0xff]
    %v1071 = vld [vmem:[#allocation10 + $0x3d8] sm:$0xff]
    %v1072 = vld [vmem:[#allocation10 + $0x3e0] sm:$0xff]
    %v1073 = vld [vmem:[#allocation10 + $0x3e8] sm:$0xff]
    %v1074 = vld [vmem:[#allocation10 + $0x3f0] sm:$0xff]
    %v1075 = vld [vmem:[#allocation10 + $0x3f8] sm:$0xff]
    %v1076 = vld [vmem:[%s4] sm:$0x1]
    %v1078 = vlaneseq
    %v1079 = vshrl.u32 %v1078, 7
    %v1080 = vsub.s32 0, %v1079
    %v1081 = vrot.slane %v1076, %v1080
    %1083 = vmatprep.subr.mxu0 0.0
    %1084 = vmatpush1.msra.mxu0 %v948
    %1085 = vmatprep.subr.mxu0 0.0
    %1086 = vmatpush1.msra.mxu0 %v949
    %1087 = vmatprep.subr.mxu0 0.0
    %1088 = vmatpush1.msra.mxu0 %v950
    %1089 = vmatprep.subr.mxu0 0.0
    %1090 = vmatpush1.msra.mxu0 %v951
    %1091 = vmatprep.subr.mxu0 0.0
    %1092 = vmatpush1.msra.mxu0 %v952
    %1093 = vmatprep.subr.mxu0 0.0
    %1094 = vmatpush1.msra.mxu0 %v953
    %1095 = vmatprep.subr.mxu0 0.0
    %1096 = vmatpush1.msra.mxu0 %v954
    %1097 = vmatprep.subr.mxu0 0.0
    %1098 = vmatpush1.msra.mxu0 %v955
    %1099 = vmatprep.subr.mxu0 0.0
    %1100 = vmatpush1.msra.mxu0 %v956
    %1101 = vmatprep.subr.mxu0 0.0
    %1102 = vmatpush1.msra.mxu0 %v957
    %1103 = vmatprep.subr.mxu0 0.0
    %1104 = vmatpush1.msra.mxu0 %v958
    %1105 = vmatprep.subr.mxu0 0.0
    %1106 = vmatpush1.msra.mxu0 %v959
    %1107 = vmatprep.subr.mxu0 0.0
    %1108 = vmatpush1.msra.mxu0 %v960
    %1109 = vmatprep.subr.mxu0 0.0
    %1110 = vmatpush1.msra.mxu0 %v961
    %1111 = vmatprep.subr.mxu0 0.0
    %1112 = vmatpush1.msra.mxu0 %v962
    %1113 = vmatprep.subr.mxu0 0.0
    %1114 = vmatpush1.msra.mxu0 %v963
    %1115 = vmatprep.subr.mxu0 0.0
    %1116 = vmatpush1.msra.mxu0 %v964
    %1117 = vmatprep.subr.mxu0 0.0
    %1118 = vmatpush1.msra.mxu0 %v965
    %1119 = vmatprep.subr.mxu0 0.0
    %1120 = vmatpush1.msra.mxu0 %v966
    %1121 = vmatprep.subr.mxu0 0.0
    %1122 = vmatpush1.msra.mxu0 %v967
    %1123 = vmatprep.subr.mxu0 0.0
    %1124 = vmatpush1.msra.mxu0 %v968
    %1125 = vmatprep.subr.mxu0 0.0
    %1126 = vmatpush1.msra.mxu0 %v969
    %1127 = vmatprep.subr.mxu0 0.0
    %1128 = vmatpush1.msra.mxu0 %v970
    %1129 = vmatprep.subr.mxu0 0.0
    %1130 = vmatpush1.msra.mxu0 %v971
    %1131 = vmatprep.subr.mxu0 0.0
    %1132 = vmatpush1.msra.mxu0 %v972
    %1133 = vmatprep.subr.mxu0 0.0
    %1134 = vmatpush1.msra.mxu0 %v973
    %1135 = vmatprep.subr.mxu0 0.0
    %1136 = vmatpush1.msra.mxu0 %v974
    %1137 = vmatprep.subr.mxu0 0.0
    %1138 = vmatpush1.msra.mxu0 %v975
    %1139 = vmatprep.subr.mxu0 0.0
    %1140 = vmatpush1.msra.mxu0 %v976
    %1141 = vmatprep.subr.mxu0 0.0
    %1142 = vmatpush1.msra.mxu0 %v977
    %1143 = vmatprep.subr.mxu0 0.0
    %1144 = vmatpush1.msra.mxu0 %v978
    %1145 = vmatprep.subr.mxu0 0.0
    %1146 = vmatpush1.msra.mxu0 %v979
    %1147 = vmatprep.mubr.f32.mxu0 %v941
    %1148 = vmatmul.mubr.f32.gmra.mrb[0].mxu0 %v940
    %v1149 = vpop.f32.mrb[0].mxu0
    %v1150 = vadd.f32 %v1081, %v1149
    %v1151 = vpop.f32.mrb[0].mxu0
    %1152 = vdwg.mxu0
    %1153 = vmatprep.subr.mxu0 0.0
    %1154 = vmatpush1.msra.mxu0 %v980
    %1155 = vmatprep.subr.mxu0 0.0
    %1156 = vmatpush1.msra.mxu0 %v981
    %1157 = vmatprep.subr.mxu0 0.0
    %1158 = vmatpush1.msra.mxu0 %v982
    %1159 = vmatprep.subr.mxu0 0.0
    %1160 = vmatpush1.msra.mxu0 %v983
    %1161 = vmatprep.subr.mxu0 0.0
    %1162 = vmatpush1.msra.mxu0 %v984
    %1163 = vmatprep.subr.mxu0 0.0
    %1164 = vmatpush1.msra.mxu0 %v985
    %1165 = vmatprep.subr.mxu0 0.0
    %1166 = vmatpush1.msra.mxu0 %v986
    %1167 = vmatprep.subr.mxu0 0.0
    %1168 = vmatpush1.msra.mxu0 %v987
    %1169 = vmatprep.subr.mxu0 0.0
    %1170 = vmatpush1.msra.mxu0 %v988
    %1171 = vmatprep.subr.mxu0 0.0
    %1172 = vmatpush1.msra.mxu0 %v989
    %1173 = vmatprep.subr.mxu0 0.0
    %1174 = vmatpush1.msra.mxu0 %v990
    %1175 = vmatprep.subr.mxu0 0.0
    %1176 = vmatpush1.msra.mxu0 %v991
    %1177 = vmatprep.subr.mxu0 0.0
    %1178 = vmatpush1.msra.mxu0 %v992
    %1179 = vmatprep.subr.mxu0 0.0
    %1180 = vmatpush1.msra.mxu0 %v993
    %1181 = vmatprep.subr.mxu0 0.0
    %1182 = vmatpush1.msra.mxu0 %v994
    %1183 = vmatprep.subr.mxu0 0.0
    %1184 = vmatpush1.msra.mxu0 %v995
    %1185 = vmatprep.subr.mxu0 0.0
    %1186 = vmatpush1.msra.mxu0 %v996
    %1187 = vmatprep.subr.mxu0 0.0
    %1188 = vmatpush1.msra.mxu0 %v997
    %1189 = vmatprep.subr.mxu0 0.0
    %1190 = vmatpush1.msra.mxu0 %v998
    %1191 = vmatprep.subr.mxu0 0.0
    %1192 = vmatpush1.msra.mxu0 %v999
    %1193 = vmatprep.subr.mxu0 0.0
    %1194 = vmatpush1.msra.mxu0 %v1000
    %1195 = vmatprep.subr.mxu0 0.0
    %1196 = vmatpush1.msra.mxu0 %v1001
    %1197 = vmatprep.subr.mxu0 0.0
    %1198 = vmatpush1.msra.mxu0 %v1002
    %1199 = vmatprep.subr.mxu0 0.0
    %1200 = vmatpush1.msra.mxu0 %v1003
    %1201 = vmatprep.subr.mxu0 0.0
    %1202 = vmatpush1.msra.mxu0 %v1004
    %1203 = vmatprep.subr.mxu0 0.0
    %1204 = vmatpush1.msra.mxu0 %v1005
    %1205 = vmatprep.subr.mxu0 0.0
    %1206 = vmatpush1.msra.mxu0 %v1006
    %1207 = vmatprep.subr.mxu0 0.0
    %1208 = vmatpush1.msra.mxu0 %v1007
    %1209 = vmatprep.subr.mxu0 0.0
    %1210 = vmatpush1.msra.mxu0 %v1008
    %1211 = vmatprep.subr.mxu0 0.0
    %1212 = vmatpush1.msra.mxu0 %v1009
    %1213 = vmatprep.subr.mxu0 0.0
    %1214 = vmatpush1.msra.mxu0 %v1010
    %1215 = vmatprep.subr.mxu0 0.0
    %1216 = vmatpush1.msra.mxu0 %v1011
    %1217 = vmatprep.mubr.f32.mxu0 %v943
    %1218 = vmatmul.mubr.f32.gmra.mrb[0].mxu0 %v942
    %v1219 = vpop.f32.mrb[0].mxu0
    %v1220 = vadd.f32 %v1150, %v1219
    %v1221 = vpop.f32.mrb[0].mxu0
    %1222 = vdwg.mxu0
    %1223 = vmatprep.subr.mxu0 0.0
    %1224 = vmatpush1.msra.mxu0 %v1012
    %1225 = vmatprep.subr.mxu0 0.0
    %1226 = vmatpush1.msra.mxu0 %v1013
    %1227 = vmatprep.subr.mxu0 0.0
    %1228 = vmatpush1.msra.mxu0 %v1014
    %1229 = vmatprep.subr.mxu0 0.0
    %1230 = vmatpush1.msra.mxu0 %v1015
    %1231 = vmatprep.subr.mxu0 0.0
    %1232 = vmatpush1.msra.mxu0 %v1016
    %1233 = vmatprep.subr.mxu0 0.0
    %1234 = vmatpush1.msra.mxu0 %v1017
    %1235 = vmatprep.subr.mxu0 0.0
    %1236 = vmatpush1.msra.mxu0 %v1018
    %1237 = vmatprep.subr.mxu0 0.0
    %1238 = vmatpush1.msra.mxu0 %v1019
    %1239 = vmatprep.subr.mxu0 0.0
    %1240 = vmatpush1.msra.mxu0 %v1020
    %1241 = vmatprep.subr.mxu0 0.0
    %1242 = vmatpush1.msra.mxu0 %v1021
    %1243 = vmatprep.subr.mxu0 0.0
    %1244 = vmatpush1.msra.mxu0 %v1022
    %1245 = vmatprep.subr.mxu0 0.0
    %1246 = vmatpush1.msra.mxu0 %v1023
    %1247 = vmatprep.subr.mxu0 0.0
    %1248 = vmatpush1.msra.mxu0 %v1024
    %1249 = vmatprep.subr.mxu0 0.0
    %1250 = vmatpush1.msra.mxu0 %v1025
    %1251 = vmatprep.subr.mxu0 0.0
    %1252 = vmatpush1.msra.mxu0 %v1026
    %1253 = vmatprep.subr.mxu0 0.0
    %1254 = vmatpush1.msra.mxu0 %v1027
    %1255 = vmatprep.subr.mxu0 0.0
    %1256 = vmatpush1.msra.mxu0 %v1028
    %1257 = vmatprep.subr.mxu0 0.0
    %1258 = vmatpush1.msra.mxu0 %v1029
    %1259 = vmatprep.subr.mxu0 0.0
    %1260 = vmatpush1.msra.mxu0 %v1030
    %1261 = vmatprep.subr.mxu0 0.0
    %1262 = vmatpush1.msra.mxu0 %v1031
    %1263 = vmatprep.subr.mxu0 0.0
    %1264 = vmatpush1.msra.mxu0 %v1032
    %1265 = vmatprep.subr.mxu0 0.0
    %1266 = vmatpush1.msra.mxu0 %v1033
    %1267 = vmatprep.subr.mxu0 0.0
    %1268 = vmatpush1.msra.mxu0 %v1034
    %1269 = vmatprep.subr.mxu0 0.0
    %1270 = vmatpush1.msra.mxu0 %v1035
    %1271 = vmatprep.subr.mxu0 0.0
    %1272 = vmatpush1.msra.mxu0 %v1036
    %1273 = vmatprep.subr.mxu0 0.0
    %1274 = vmatpush1.msra.mxu0 %v1037
    %1275 = vmatprep.subr.mxu0 0.0
    %1276 = vmatpush1.msra.mxu0 %v1038
    %1277 = vmatprep.subr.mxu0 0.0
    %1278 = vmatpush1.msra.mxu0 %v1039
    %1279 = vmatprep.subr.mxu0 0.0
    %1280 = vmatpush1.msra.mxu0 %v1040
    %1281 = vmatprep.subr.mxu0 0.0
    %1282 = vmatpush1.msra.mxu0 %v1041
    %1283 = vmatprep.subr.mxu0 0.0
    %1284 = vmatpush1.msra.mxu0 %v1042
    %1285 = vmatprep.subr.mxu0 0.0
    %1286 = vmatpush1.msra.mxu0 %v1043
    %1287 = vmatprep.mubr.f32.mxu0 %v945
    %1288 = vmatmul.mubr.f32.gmra.mrb[0].mxu0 %v944
    %v1289 = vpop.f32.mrb[0].mxu0
    %v1290 = vadd.f32 %v1220, %v1289
    %v1291 = vpop.f32.mrb[0].mxu0
    %1292 = vdwg.mxu0
    %1293 = vmatprep.subr.mxu0 0.0
    %1294 = vmatpush1.msra.mxu0 %v1044
    %1295 = vmatprep.subr.mxu0 0.0
    %1296 = vmatpush1.msra.mxu0 %v1045
    %1297 = vmatprep.subr.mxu0 0.0
    %1298 = vmatpush1.msra.mxu0 %v1046
    %1299 = vmatprep.subr.mxu0 0.0
    %1300 = vmatpush1.msra.mxu0 %v1047
    %1301 = vmatprep.subr.mxu0 0.0
    %1302 = vmatpush1.msra.mxu0 %v1048
    %1303 = vmatprep.subr.mxu0 0.0
    %1304 = vmatpush1.msra.mxu0 %v1049
    %1305 = vmatprep.subr.mxu0 0.0
    %1306 = vmatpush1.msra.mxu0 %v1050
    %1307 = vmatprep.subr.mxu0 0.0
    %1308 = vmatpush1.msra.mxu0 %v1051
    %1309 = vmatprep.subr.mxu0 0.0
    %1310 = vmatpush1.msra.mxu0 %v1052
    %1311 = vmatprep.subr.mxu0 0.0
    %1312 = vmatpush1.msra.mxu0 %v1053
    %1313 = vmatprep.subr.mxu0 0.0
    %1314 = vmatpush1.msra.mxu0 %v1054
    %1315 = vmatprep.subr.mxu0 0.0
    %1316 = vmatpush1.msra.mxu0 %v1055
    %1317 = vmatprep.subr.mxu0 0.0
    %1318 = vmatpush1.msra.mxu0 %v1056
    %1319 = vmatprep.subr.mxu0 0.0
    %1320 = vmatpush1.msra.mxu0 %v1057
    %1321 = vmatprep.subr.mxu0 0.0
    %1322 = vmatpush1.msra.mxu0 %v1058
    %1323 = vmatprep.subr.mxu0 0.0
    %1324 = vmatpush1.msra.mxu0 %v1059
    %1325 = vmatprep.subr.mxu0 0.0
    %1326 = vmatpush1.msra.mxu0 %v1060
    %1327 = vmatprep.subr.mxu0 0.0
    %1328 = vmatpush1.msra.mxu0 %v1061
    %1329 = vmatprep.subr.mxu0 0.0
    %1330 = vmatpush1.msra.mxu0 %v1062
    %1331 = vmatprep.subr.mxu0 0.0
    %1332 = vmatpush1.msra.mxu0 %v1063
    %1333 = vmatprep.subr.mxu0 0.0
    %1334 = vmatpush1.msra.mxu0 %v1064
    %1335 = vmatprep.subr.mxu0 0.0
    %1336 = vmatpush1.msra.mxu0 %v1065
    %1337 = vmatprep.subr.mxu0 0.0
    %1338 = vmatpush1.msra.mxu0 %v1066
    %1339 = vmatprep.subr.mxu0 0.0
    %1340 = vmatpush1.msra.mxu0 %v1067
    %1341 = vmatprep.subr.mxu0 0.0
    %1342 = vmatpush1.msra.mxu0 %v1068
    %1343 = vmatprep.subr.mxu0 0.0
    %1344 = vmatpush1.msra.mxu0 %v1069
    %1345 = vmatprep.subr.mxu0 0.0
    %1346 = vmatpush1.msra.mxu0 %v1070
    %1347 = vmatprep.subr.mxu0 0.0
    %1348 = vmatpush1.msra.mxu0 %v1071
    %1349 = vmatprep.subr.mxu0 0.0
    %1350 = vmatpush1.msra.mxu0 %v1072
    %1351 = vmatprep.subr.mxu0 0.0
    %1352 = vmatpush1.msra.mxu0 %v1073
    %1353 = vmatprep.subr.mxu0 0.0
    %1354 = vmatpush1.msra.mxu0 %v1074
    %1355 = vmatprep.subr.mxu0 0.0
    %1356 = vmatpush1.msra.mxu0 %v1075
    %1357 = vmatprep.mubr.f32.mxu0 %v947
    %1358 = vmatmul.mubr.f32.gmra.mrb[0].mxu0 %v946
    %v1359 = vpop.f32.mrb[0].mxu0
    %v1360 = vadd.f32 %v1290, %v1359
    %v1361 = vpop.f32.mrb[0].mxu0
    %1362 = vdwg.mxu0
    %1363 = vst [vmem:[#allocation12] sm:$0xff] %v1360
    // Predicated region
    $region42: #{tpu_custom_call.1} parent=1 // pred_check
      _
    $region43: #{tpu_custom_call.1} parent=1 // pred_check_branch
      %1365 = sbr.rel (0) target = $region45
    $region44: #{tpu_custom_call.1} parent=1 // pred_region
      %s1367 = ssub.s32 128, 128
      %1368 = vsyncadd [#allocation5], %s1367
      %s1370 = sshll.u32 [#allocation12], 4
      %s1371 = int_to_ptr.vmem [resolvable:$true] %s1370
      %1373 = dma.vmem_to_hbm [thread:$0]  %s1371, 128, %s5, [#allocation5]
    $region45: #{tpu_custom_call.1} parent=1 // pred_fallthru
      _
    // Predicated region
    $region46: #{tpu_custom_call.1} parent=1 // pred_check
      _
    $region47: #{tpu_custom_call.1} parent=1 // pred_check_branch
      %1375 = sbr.rel (0) target = $region49
    $region48: #{tpu_custom_call.1} parent=1 // pred_region
      %1376 = dma.done [#allocation5], 128
    $region49: #{tpu_custom_call.1} parent=1 // pred_fallthru
      _
    %1377 = vsyncpa [#allocation4], 1
    %1378 = vsyncpa [#allocation11], 1
    %1379 = vsyncpa [#allocation5], 1
    %1380 = vsyncpa [#allocation6], 1
    %1381 = vsyncpa [#allocation7], 1

</llo_original>
